<compile_context>
chip_gen: v5e
topology: v5e:2x2
jax: 0.10.0
libtpu: 0.0.40
codegen_flags: <defaults>
</compile_context>

<pallas_src>
import math

import jax
import jax.numpy as jnp
from jax.experimental import pallas as pl
from jax.experimental.pallas import tpu as pltpu


# -----------------------------------------------------------------------------
# Kernel: one tile of TB batch elements.
#
# Semantics reproduced from the PyTorch code:
#   bmul(L, X.unsqueeze(1)) with einsum 'bijk,bqjp->bijp' is
#       out[b,k,n,c] = (sum_m L[b,k,n,m]) * X[b,n,c]
#   so each ChebConv layer reduces to
#       real[b,n,o] = sum_k lsr[b,k,n]*(Xr@Wr[k])[n,o] - lsi[b,k,n]*(Xi@Wi[k])[n,o]
#       imag[b,n,o] = sum_k lsi[b,k,n]*(Xr@Wr[k])[n,o] + lsr[b,k,n]*(Xi@Wi[k])[n,o]
#   (ChebConv bias params exist but are never used in forward.)
#   Then complex_relu, concat(real, imag), Conv1d(k=1) over channels, mean over
#   nodes.  concat + conv + mean == mean(real)@Wc_r + mean(imag)@Wc_i + b.
# -----------------------------------------------------------------------------
def chebnet_kernel(lsr_ref, lsi_ref, xr_ref, xi_ref,
                   w1r_ref, w1i_ref, w2r_ref, w2i_ref,
                   cw_ref, cb_ref, out_ref):
    # lsr_ref/lsi_ref : (TB, K1, N)   VMEM  Laplacian row sums (nodes on lanes)
    # xr_ref/xi_ref   : (TB, Cin, N)  VMEM  node features (nodes on lanes)
    # w1*_ref         : (Cin*K1*F,)   SMEM  ChebConv1 weights, index c*K1F + k*F + o
    # w2*_ref         : (F*K1*F,)     SMEM  ChebConv2 weights, same packing
    # cw_ref          : (2F*F,)       SMEM  Conv1d(k=1) weight, index j*F + f
    # cb_ref          : (F,)          SMEM  Conv1d bias
    # out_ref         : (TB, 1, F)    VMEM  per-batch output rows
    TB, K1, N = lsr_ref.shape
    Cin = xr_ref.shape[1]
    F = out_ref.shape[-1]
    KF = K1 * F

    lsr = lsr_ref[...]
    lsi = lsi_ref[...]
    xr = xr_ref[...]
    xi = xi_ref[...]

    # Per-k complex scales, shared by BOTH Cheb layers (same Laplacian).
    sr = [lsr[:, k, :] for k in range(K1)]          # each (TB, N), lane-dense
    si = [lsi[:, k, :] for k in range(K1)]

    def cheb_layer(xr_list, xi_list, wr_ref, wi_ref):
        # xr_list/xi_list: lists of C arrays, each (TB, N) with nodes on lanes.
        # Channel mix = unrolled scalar-broadcast mul-adds on the VPU (no MXU
        # push/pop latency for these degenerate contraction widths).
        C = len(xr_list)
        out_r = [None] * F
        out_i = [None] * F
        for k in range(K1):
            sk_r, sk_i = sr[k], si[k]
            for o in range(F):
                col = k * F + o
                yr = wr_ref[col] * xr_list[0]
                yi = wi_ref[col] * xi_list[0]
                for c in range(1, C):
                    yr = yr + wr_ref[c * KF + col] * xr_list[c]
                    yi = yi + wi_ref[c * KF + col] * xi_list[c]
                tr = sk_r * yr - sk_i * yi
                ti = sk_i * yr + sk_r * yi
                # init accumulator with the k=0 term (no zero broadcast)
                out_r[o] = tr if out_r[o] is None else out_r[o] + tr
                out_i[o] = ti if out_i[o] is None else out_i[o] + ti
        return out_r, out_i

    xr0 = [xr[:, c, :] for c in range(Cin)]
    xi0 = [xi[:, c, :] for c in range(Cin)]

    # cheb_conv1 (Cin -> F), then cheb_conv2 (F -> F)
    r1, i1 = cheb_layer(xr0, xi0, w1r_ref, w1i_ref)
    r2, i2 = cheb_layer(r1, i1, w2r_ref, w2i_ref)

    # complex ReLU (selects, not mask-mul) + node mean (XLU lane reduction).
    rbar, ibar = [], []
    for o in range(F):
        keep = r2[o] >= 0.0
        ro = jnp.where(keep, r2[o], 0.0)
        io = jnp.where(keep, i2[o], 0.0)
        rbar.append(jnp.mean(ro, axis=-1, keepdims=True))   # (TB, 1)
        ibar.append(jnp.mean(io, axis=-1, keepdims=True))   # (TB, 1)

    # 1x1 conv + bias applied AFTER the node mean (exact: conv is linear).
    # cw[j*F + f] = conv_w[f, j]; rows 0..F-1 act on real, F..2F-1 on imag.
    cols = []
    for f in range(F):
        acc = rbar[0] * cw_ref[f] + ibar[0] * cw_ref[F * F + f]
        for o in range(1, F):
            acc = acc + rbar[o] * cw_ref[o * F + f] + ibar[o] * cw_ref[(F + o) * F + f]
        cols.append(acc + cb_ref[f])
    out_ref[...] = jnp.stack(cols, axis=-1)                  # (TB, 1, F)


# -----------------------------------------------------------------------------
# Wrapper: VMEM-budgeted batch tiling + layout plumbing.
# -----------------------------------------------------------------------------
def _vmem_capacity_bytes():
    try:
        cap = getattr(pltpu.get_tpu_info(), "vmem_capacity_bytes", None)
        if cap:
            return int(cap)
    except Exception:
        pass
    return 64 * 1024 * 1024          # conservative (v7x per-TensorCore)


def _pick_batch_tile(B, K1, N, Cin, tile_budget_bytes):
    # Per-batch live input bytes (lsum r/i + X r/i, f32), x2 for the
    # BlockSpec double buffering the pipeline inserts.
    per_b = (2 * K1 * N + 2 * Cin * N) * 4 * 2
    tb = max(1, tile_budget_bytes // max(per_b, 1))
    if B >= 2:
        tb = min(tb, B // 2)        # >=2 grid steps: both v7x TensorCores work
    return max(1, min(tb, B))


def chebnet_forward(l_real, l_imag, x_real, x_imag,
                    w1r, w1i, w2r, w2i, conv_w, conv_b, *, batch_tile=None):
    B, K1, N, _ = l_real.shape
    Cin = x_real.shape[-1]
    F = w1r.shape[-1]

    # (1) Laplacian only enters via its row sum -> hoist; (B, K1, N) lane-dense.
    lsum_r = jnp.sum(l_real, axis=-1)
    lsum_i = jnp.sum(l_imag, axis=-1)

    # (2) Nodes-on-lanes feature layout.
    xrT = jnp.swapaxes(x_real, 1, 2)              # (B, Cin, N)
    xiT = jnp.swapaxes(x_imag, 1, 2)

    # (3) All weights flattened for SMEM scalar reads (tiny padding footprint).
    #     index [c*(K1*F) + k*F + o] = W[k, c, o]
    w1r_f = jnp.moveaxis(w1r, 0, 1).reshape(-1)
    w1i_f = jnp.moveaxis(w1i, 0, 1).reshape(-1)
    w2r_f = jnp.moveaxis(w2r, 0, 1).reshape(-1)
    w2i_f = jnp.moveaxis(w2i, 0, 1).reshape(-1)
    cw_f = conv_w.T.reshape(-1)                   # [j*F + f] = conv_w[f, j]
    cb_f = conv_b.reshape(-1)                     # (F,)

    # (4) Generation-aware VMEM budgeting.
    vmem_cap = _vmem_capacity_bytes()
    tile_budget = int(vmem_cap * 0.35)
    TB = batch_tile or _pick_batch_tile(B, K1, N, Cin, tile_budget)

    # Pad the batch so TB need not divide B (avoids the TB=1 cliff for prime B).
    Bp = ((B + TB - 1) // TB) * TB
    if Bp != B:
        pad = ((0, Bp - B), (0, 0), (0, 0))
        lsum_r = jnp.pad(lsum_r, pad)
        lsum_i = jnp.pad(lsum_i, pad)
        xrT = jnp.pad(xrT, pad)
        xiT = jnp.pad(xiT, pad)

    grid = (Bp // TB,)

    def smem_spec():
        return pl.BlockSpec(memory_space=pltpu.MemorySpace.SMEM)

    grid_spec = pltpu.PrefetchScalarGridSpec(
        num_scalar_prefetch=0,
        grid=grid,
        in_specs=[
            pl.BlockSpec((TB, K1, N), lambda b: (b, 0, 0)),     # lsum real
            pl.BlockSpec((TB, K1, N), lambda b: (b, 0, 0)),     # lsum imag
            pl.BlockSpec((TB, Cin, N), lambda b: (b, 0, 0)),    # X real
            pl.BlockSpec((TB, Cin, N), lambda b: (b, 0, 0)),    # X imag
            smem_spec(), smem_spec(),                           # W1 real/imag
            smem_spec(), smem_spec(),                           # W2 real/imag
            smem_spec(), smem_spec(),                           # conv W, conv b
        ],
        out_specs=pl.BlockSpec((TB, 1, F), lambda b: (b, 0, 0)),
    )

    vmem_limit = int(min(vmem_cap * 3 // 4, 128 * 1024 * 1024))

    out3 = pl.pallas_call(
        chebnet_kernel,
        out_shape=jax.ShapeDtypeStruct((Bp, 1, F), jnp.float32),
        grid_spec=grid_spec,
        compiler_params=pltpu.CompilerParams(
            dimension_semantics=("parallel",),
            vmem_limit_bytes=vmem_limit),
    )(lsum_r, lsum_i, xrT, xiT, w1r_f, w1i_f, w2r_f, w2i_f, cw_f, cb_f)

    return out3[:B, 0, :]


# -----------------------------------------------------------------------------
# Pure-JAX reference (mirrors the PyTorch forward) for a correctness check.
# -----------------------------------------------------------------------------
def chebnet_ref(l_real, l_imag, x_real, x_imag, w1r, w1i, w2r, w2i, conv_w, conv_b):
    lsr = l_real.sum(-1)   # (B, K1, N)
    lsi = l_imag.sum(-1)

    def layer(xr, xi, wr, wi):
        yr = jnp.einsum('bnc,kco->bkno', xr, wr)
        yi = jnp.einsum('bnc,kco->bkno', xi, wi)
        r = (lsr[..., None] * yr - lsi[..., None] * yi).sum(1)
        im = (lsi[..., None] * yr + lsr[..., None] * yi).sum(1)
        return r, im

    r1, i1 = layer(x_real, x_imag, w1r, w1i)
    r2, i2 = layer(r1, i1, w2r, w2i)
    mask = (r2 >= 0).astype(jnp.float32)
    r2, i2 = mask * r2, mask * i2
    x = jnp.concatenate([r2, i2], -1)                               # (B, N, 2F)
    y = jnp.einsum('bnj,fj->bnf', x, conv_w) + conv_b.reshape(1, 1, -1)
    return y.mean(axis=1)


# -----------------------------------------------------------------------------
# Deterministic parameter initialization (shapes from the module __init__).
# -----------------------------------------------------------------------------
def cheb_weights(key, K1, in_c, out_c):
    stdv = 1.0 / math.sqrt(out_c)
    kr, ki = jax.random.split(key)
    wr = jax.random.uniform(kr, (K1, in_c, out_c), jnp.float32, -stdv, stdv)
    wi = jax.random.uniform(ki, (K1, in_c, out_c), jnp.float32, -stdv, stdv)
    mag = jnp.sqrt(wr ** 2 + wi ** 2)
    return wr / mag, wi / mag   # magnitude-normalized, as in ChebConv.__init__


if __name__ == "__main__":
    # Small shapes consistent with the module:
    B, N, in_c = 2, 16, 4         # batch, nodes, input channels
    num_filter, K = 2, 2          # ChebNet defaults
    K1 = K + 1

    key = jax.random.PRNGKey(0)
    k_lr, k_li, k_xr, k_xi, k_w1, k_w2, k_cw, k_cb = jax.random.split(key, 8)

    # Inputs (laplacian is complex in PyTorch -> carried as real/imag here)
    l_real = jax.random.normal(k_lr, (B, K1, N, N), jnp.float32)
    l_imag = jax.random.normal(k_li, (B, K1, N, N), jnp.float32)
    x_real = jax.random.normal(k_xr, (B, N, in_c), jnp.float32)
    x_imag = jax.random.normal(k_xi, (B, N, in_c), jnp.float32)

    # ChebConv parameters (bias params exist in __init__ but unused in forward)
    w1r, w1i = cheb_weights(k_w1, K1, in_c, num_filter)
    w2r, w2i = cheb_weights(k_w2, K1, num_filter, num_filter)

    # Conv1d(num_filter*2 -> num_filter, kernel_size=1): weight (F, 2F), bias (F,)
    bound = 1.0 / math.sqrt(2 * num_filter)
    conv_w = jax.random.uniform(k_cw, (num_filter, 2 * num_filter), jnp.float32,
                                -bound, bound)
    conv_b = jax.random.uniform(k_cb, (1, num_filter), jnp.float32, -bound, bound)

    # TODO(synk): Model also defines fc1/fc2/prediction layers (and the unused
    # attention / dropout / bn / linear / tanh submodules) that are not part of
    # forward(); they are omitted here.

    out = chebnet_forward(l_real, l_imag, x_real, x_imag,
                          w1r, w1i, w2r, w2i, conv_w, conv_b)
    out = jax.block_until_ready(out)          # (B, F); final .squeeze() is a no-op

    ref = chebnet_ref(l_real, l_imag, x_real, x_imag,
                      w1r, w1i, w2r, w2i, conv_w, conv_b)
    assert out.shape == (B, num_filter)
    assert jnp.allclose(out, ref, atol=1e-4, rtol=1e-4)

    print("KERNEL_OK")
</pallas_src>

<mosaic_0001>
module attributes {stable_mosaic.version = 11 : i64} {
  func.func @chebnet_kernel(%arg0: i32, %arg1: memref<1x3x16xf32, #tpu.memory_space<vmem>>, %arg2: memref<1x3x16xf32, #tpu.memory_space<vmem>>, %arg3: memref<1x4x16xf32, #tpu.memory_space<vmem>>, %arg4: memref<1x4x16xf32, #tpu.memory_space<vmem>>, %arg5: memref<24xf32, #tpu.memory_space<smem>>, %arg6: memref<24xf32, #tpu.memory_space<smem>>, %arg7: memref<12xf32, #tpu.memory_space<smem>>, %arg8: memref<12xf32, #tpu.memory_space<smem>>, %arg9: memref<8xf32, #tpu.memory_space<smem>>, %arg10: memref<2xf32, #tpu.memory_space<smem>>, %arg11: memref<1x1x2xf32, #tpu.memory_space<vmem>>) attributes {dimension_semantics = [#tpu.dimension_semantics<parallel>], iteration_bounds = array<i64: 2>, scalar_prefetch = 0 : i64, scratch_operands = 0 : i64, tpu.core_type = #tpu.core_type<tc>, window_params = [{transform_indices = @transform_0, window_bounds = array<i64: 1, 3, 16>}, {transform_indices = @transform_1, window_bounds = array<i64: 1, 3, 16>}, {transform_indices = @transform_2, window_bounds = array<i64: 1, 4, 16>}, {transform_indices = @transform_3, window_bounds = array<i64: 1, 4, 16>}, {transform_indices = @transform_4, window_bounds = array<i64: 24>}, {transform_indices = @transform_5, window_bounds = array<i64: 24>}, {transform_indices = @transform_6, window_bounds = array<i64: 12>}, {transform_indices = @transform_7, window_bounds = array<i64: 12>}, {transform_indices = @transform_8, window_bounds = array<i64: 8>}, {transform_indices = @transform_9, window_bounds = array<i64: 2>}, {transform_indices = @transform_10, window_bounds = array<i64: 1, 1, 2>}]} {
    %c0 = arith.constant 0 : index
    %c0_0 = arith.constant 0 : index
    %c0_1 = arith.constant 0 : index
    %0 = vector.load %arg1[%c0, %c0_0, %c0_1] : memref<1x3x16xf32, #tpu.memory_space<vmem>>, vector<1x3x16xf32>
    %c0_2 = arith.constant 0 : index
    %c0_3 = arith.constant 0 : index
    %c0_4 = arith.constant 0 : index
    %1 = vector.load %arg2[%c0_2, %c0_3, %c0_4] : memref<1x3x16xf32, #tpu.memory_space<vmem>>, vector<1x3x16xf32>
    %c0_5 = arith.constant 0 : index
    %c0_6 = arith.constant 0 : index
    %c0_7 = arith.constant 0 : index
    %2 = vector.load %arg3[%c0_5, %c0_6, %c0_7] : memref<1x4x16xf32, #tpu.memory_space<vmem>>, vector<1x4x16xf32>
    %c0_8 = arith.constant 0 : index
    %c0_9 = arith.constant 0 : index
    %c0_10 = arith.constant 0 : index
    %3 = vector.load %arg4[%c0_8, %c0_9, %c0_10] : memref<1x4x16xf32, #tpu.memory_space<vmem>>, vector<1x4x16xf32>
    %4 = vector.extract_strided_slice %0 {offsets = [0, 0, 0], sizes = [1, 1, 16], strides = [1, 1, 1]} : vector<1x3x16xf32> to vector<1x1x16xf32>
    %5 = vector.shape_cast %4 : vector<1x1x16xf32> to vector<1x16xf32>
    %6 = vector.extract_strided_slice %0 {offsets = [0, 1, 0], sizes = [1, 1, 16], strides = [1, 1, 1]} : vector<1x3x16xf32> to vector<1x1x16xf32>
    %7 = vector.shape_cast %6 : vector<1x1x16xf32> to vector<1x16xf32>
    %8 = vector.extract_strided_slice %0 {offsets = [0, 2, 0], sizes = [1, 1, 16], strides = [1, 1, 1]} : vector<1x3x16xf32> to vector<1x1x16xf32>
    %9 = vector.shape_cast %8 : vector<1x1x16xf32> to vector<1x16xf32>
    %10 = vector.extract_strided_slice %1 {offsets = [0, 0, 0], sizes = [1, 1, 16], strides = [1, 1, 1]} : vector<1x3x16xf32> to vector<1x1x16xf32>
    %11 = vector.shape_cast %10 : vector<1x1x16xf32> to vector<1x16xf32>
    %12 = vector.extract_strided_slice %1 {offsets = [0, 1, 0], sizes = [1, 1, 16], strides = [1, 1, 1]} : vector<1x3x16xf32> to vector<1x1x16xf32>
    %13 = vector.shape_cast %12 : vector<1x1x16xf32> to vector<1x16xf32>
    %14 = vector.extract_strided_slice %1 {offsets = [0, 2, 0], sizes = [1, 1, 16], strides = [1, 1, 1]} : vector<1x3x16xf32> to vector<1x1x16xf32>
    %15 = vector.shape_cast %14 : vector<1x1x16xf32> to vector<1x16xf32>
    %16 = vector.extract_strided_slice %2 {offsets = [0, 0, 0], sizes = [1, 1, 16], strides = [1, 1, 1]} : vector<1x4x16xf32> to vector<1x1x16xf32>
    %17 = vector.shape_cast %16 : vector<1x1x16xf32> to vector<1x16xf32>
    %18 = vector.extract_strided_slice %2 {offsets = [0, 1, 0], sizes = [1, 1, 16], strides = [1, 1, 1]} : vector<1x4x16xf32> to vector<1x1x16xf32>
    %19 = vector.shape_cast %18 : vector<1x1x16xf32> to vector<1x16xf32>
    %20 = vector.extract_strided_slice %2 {offsets = [0, 2, 0], sizes = [1, 1, 16], strides = [1, 1, 1]} : vector<1x4x16xf32> to vector<1x1x16xf32>
    %21 = vector.shape_cast %20 : vector<1x1x16xf32> to vector<1x16xf32>
    %22 = vector.extract_strided_slice %2 {offsets = [0, 3, 0], sizes = [1, 1, 16], strides = [1, 1, 1]} : vector<1x4x16xf32> to vector<1x1x16xf32>
    %23 = vector.shape_cast %22 : vector<1x1x16xf32> to vector<1x16xf32>
    %24 = vector.extract_strided_slice %3 {offsets = [0, 0, 0], sizes = [1, 1, 16], strides = [1, 1, 1]} : vector<1x4x16xf32> to vector<1x1x16xf32>
    %25 = vector.shape_cast %24 : vector<1x1x16xf32> to vector<1x16xf32>
    %26 = vector.extract_strided_slice %3 {offsets = [0, 1, 0], sizes = [1, 1, 16], strides = [1, 1, 1]} : vector<1x4x16xf32> to vector<1x1x16xf32>
    %27 = vector.shape_cast %26 : vector<1x1x16xf32> to vector<1x16xf32>
    %28 = vector.extract_strided_slice %3 {offsets = [0, 2, 0], sizes = [1, 1, 16], strides = [1, 1, 1]} : vector<1x4x16xf32> to vector<1x1x16xf32>
    %29 = vector.shape_cast %28 : vector<1x1x16xf32> to vector<1x16xf32>
    %30 = vector.extract_strided_slice %3 {offsets = [0, 3, 0], sizes = [1, 1, 16], strides = [1, 1, 1]} : vector<1x4x16xf32> to vector<1x1x16xf32>
    %31 = vector.shape_cast %30 : vector<1x1x16xf32> to vector<1x16xf32>
    %c0_11 = arith.constant 0 : index
    %32 = memref.load %arg5[%c0_11] : memref<24xf32, #tpu.memory_space<smem>>
    %33 = vector.broadcast %32 : f32 to vector<1x16xf32>
    %34 = arith.mulf %33, %17 : vector<1x16xf32>
    %c0_12 = arith.constant 0 : index
    %35 = memref.load %arg6[%c0_12] : memref<24xf32, #tpu.memory_space<smem>>
    %36 = vector.broadcast %35 : f32 to vector<1x16xf32>
    %37 = arith.mulf %36, %25 : vector<1x16xf32>
    %c6 = arith.constant 6 : index
    %38 = memref.load %arg5[%c6] : memref<24xf32, #tpu.memory_space<smem>>
    %39 = vector.broadcast %38 : f32 to vector<1x16xf32>
    %40 = arith.mulf %39, %19 : vector<1x16xf32>
    %41 = arith.addf %34, %40 : vector<1x16xf32>
    %c6_13 = arith.constant 6 : index
    %42 = memref.load %arg6[%c6_13] : memref<24xf32, #tpu.memory_space<smem>>
    %43 = vector.broadcast %42 : f32 to vector<1x16xf32>
    %44 = arith.mulf %43, %27 : vector<1x16xf32>
    %45 = arith.addf %37, %44 : vector<1x16xf32>
    %c12 = arith.constant 12 : index
    %46 = memref.load %arg5[%c12] : memref<24xf32, #tpu.memory_space<smem>>
    %47 = vector.broadcast %46 : f32 to vector<1x16xf32>
    %48 = arith.mulf %47, %21 : vector<1x16xf32>
    %49 = arith.addf %41, %48 : vector<1x16xf32>
    %c12_14 = arith.constant 12 : index
    %50 = memref.load %arg6[%c12_14] : memref<24xf32, #tpu.memory_space<smem>>
    %51 = vector.broadcast %50 : f32 to vector<1x16xf32>
    %52 = arith.mulf %51, %29 : vector<1x16xf32>
    %53 = arith.addf %45, %52 : vector<1x16xf32>
    %c18 = arith.constant 18 : index
    %54 = memref.load %arg5[%c18] : memref<24xf32, #tpu.memory_space<smem>>
    %55 = vector.broadcast %54 : f32 to vector<1x16xf32>
    %56 = arith.mulf %55, %23 : vector<1x16xf32>
    %57 = arith.addf %49, %56 : vector<1x16xf32>
    %c18_15 = arith.constant 18 : index
    %58 = memref.load %arg6[%c18_15] : memref<24xf32, #tpu.memory_space<smem>>
    %59 = vector.broadcast %58 : f32 to vector<1x16xf32>
    %60 = arith.mulf %59, %31 : vector<1x16xf32>
    %61 = arith.addf %53, %60 : vector<1x16xf32>
    %62 = arith.mulf %5, %57 : vector<1x16xf32>
    %63 = arith.mulf %11, %61 : vector<1x16xf32>
    %64 = arith.subf %62, %63 : vector<1x16xf32>
    %65 = arith.mulf %11, %57 : vector<1x16xf32>
    %66 = arith.mulf %5, %61 : vector<1x16xf32>
    %67 = arith.addf %65, %66 : vector<1x16xf32>
    %c1 = arith.constant 1 : index
    %68 = memref.load %arg5[%c1] : memref<24xf32, #tpu.memory_space<smem>>
    %69 = vector.broadcast %68 : f32 to vector<1x16xf32>
    %70 = arith.mulf %69, %17 : vector<1x16xf32>
    %c1_16 = arith.constant 1 : index
    %71 = memref.load %arg6[%c1_16] : memref<24xf32, #tpu.memory_space<smem>>
    %72 = vector.broadcast %71 : f32 to vector<1x16xf32>
    %73 = arith.mulf %72, %25 : vector<1x16xf32>
    %c7 = arith.constant 7 : index
    %74 = memref.load %arg5[%c7] : memref<24xf32, #tpu.memory_space<smem>>
    %75 = vector.broadcast %74 : f32 to vector<1x16xf32>
    %76 = arith.mulf %75, %19 : vector<1x16xf32>
    %77 = arith.addf %70, %76 : vector<1x16xf32>
    %c7_17 = arith.constant 7 : index
    %78 = memref.load %arg6[%c7_17] : memref<24xf32, #tpu.memory_space<smem>>
    %79 = vector.broadcast %78 : f32 to vector<1x16xf32>
    %80 = arith.mulf %79, %27 : vector<1x16xf32>
    %81 = arith.addf %73, %80 : vector<1x16xf32>
    %c13 = arith.constant 13 : index
    %82 = memref.load %arg5[%c13] : memref<24xf32, #tpu.memory_space<smem>>
    %83 = vector.broadcast %82 : f32 to vector<1x16xf32>
    %84 = arith.mulf %83, %21 : vector<1x16xf32>
    %85 = arith.addf %77, %84 : vector<1x16xf32>
    %c13_18 = arith.constant 13 : index
    %86 = memref.load %arg6[%c13_18] : memref<24xf32, #tpu.memory_space<smem>>
    %87 = vector.broadcast %86 : f32 to vector<1x16xf32>
    %88 = arith.mulf %87, %29 : vector<1x16xf32>
    %89 = arith.addf %81, %88 : vector<1x16xf32>
    %c19 = arith.constant 19 : index
    %90 = memref.load %arg5[%c19] : memref<24xf32, #tpu.memory_space<smem>>
    %91 = vector.broadcast %90 : f32 to vector<1x16xf32>
    %92 = arith.mulf %91, %23 : vector<1x16xf32>
    %93 = arith.addf %85, %92 : vector<1x16xf32>
    %c19_19 = arith.constant 19 : index
    %94 = memref.load %arg6[%c19_19] : memref<24xf32, #tpu.memory_space<smem>>
    %95 = vector.broadcast %94 : f32 to vector<1x16xf32>
    %96 = arith.mulf %95, %31 : vector<1x16xf32>
    %97 = arith.addf %89, %96 : vector<1x16xf32>
    %98 = arith.mulf %5, %93 : vector<1x16xf32>
    %99 = arith.mulf %11, %97 : vector<1x16xf32>
    %100 = arith.subf %98, %99 : vector<1x16xf32>
    %101 = arith.mulf %11, %93 : vector<1x16xf32>
    %102 = arith.mulf %5, %97 : vector<1x16xf32>
    %103 = arith.addf %101, %102 : vector<1x16xf32>
    %c2 = arith.constant 2 : index
    %104 = memref.load %arg5[%c2] : memref<24xf32, #tpu.memory_space<smem>>
    %105 = vector.broadcast %104 : f32 to vector<1x16xf32>
    %106 = arith.mulf %105, %17 : vector<1x16xf32>
    %c2_20 = arith.constant 2 : index
    %107 = memref.load %arg6[%c2_20] : memref<24xf32, #tpu.memory_space<smem>>
    %108 = vector.broadcast %107 : f32 to vector<1x16xf32>
    %109 = arith.mulf %108, %25 : vector<1x16xf32>
    %c8 = arith.constant 8 : index
    %110 = memref.load %arg5[%c8] : memref<24xf32, #tpu.memory_space<smem>>
    %111 = vector.broadcast %110 : f32 to vector<1x16xf32>
    %112 = arith.mulf %111, %19 : vector<1x16xf32>
    %113 = arith.addf %106, %112 : vector<1x16xf32>
    %c8_21 = arith.constant 8 : index
    %114 = memref.load %arg6[%c8_21] : memref<24xf32, #tpu.memory_space<smem>>
    %115 = vector.broadcast %114 : f32 to vector<1x16xf32>
    %116 = arith.mulf %115, %27 : vector<1x16xf32>
    %117 = arith.addf %109, %116 : vector<1x16xf32>
    %c14 = arith.constant 14 : index
    %118 = memref.load %arg5[%c14] : memref<24xf32, #tpu.memory_space<smem>>
    %119 = vector.broadcast %118 : f32 to vector<1x16xf32>
    %120 = arith.mulf %119, %21 : vector<1x16xf32>
    %121 = arith.addf %113, %120 : vector<1x16xf32>
    %c14_22 = arith.constant 14 : index
    %122 = memref.load %arg6[%c14_22] : memref<24xf32, #tpu.memory_space<smem>>
    %123 = vector.broadcast %122 : f32 to vector<1x16xf32>
    %124 = arith.mulf %123, %29 : vector<1x16xf32>
    %125 = arith.addf %117, %124 : vector<1x16xf32>
    %c20 = arith.constant 20 : index
    %126 = memref.load %arg5[%c20] : memref<24xf32, #tpu.memory_space<smem>>
    %127 = vector.broadcast %126 : f32 to vector<1x16xf32>
    %128 = arith.mulf %127, %23 : vector<1x16xf32>
    %129 = arith.addf %121, %128 : vector<1x16xf32>
    %c20_23 = arith.constant 20 : index
    %130 = memref.load %arg6[%c20_23] : memref<24xf32, #tpu.memory_space<smem>>
    %131 = vector.broadcast %130 : f32 to vector<1x16xf32>
    %132 = arith.mulf %131, %31 : vector<1x16xf32>
    %133 = arith.addf %125, %132 : vector<1x16xf32>
    %134 = arith.mulf %7, %129 : vector<1x16xf32>
    %135 = arith.mulf %13, %133 : vector<1x16xf32>
    %136 = arith.subf %134, %135 : vector<1x16xf32>
    %137 = arith.mulf %13, %129 : vector<1x16xf32>
    %138 = arith.mulf %7, %133 : vector<1x16xf32>
    %139 = arith.addf %137, %138 : vector<1x16xf32>
    %140 = arith.addf %64, %136 : vector<1x16xf32>
    %141 = arith.addf %67, %139 : vector<1x16xf32>
    %c3 = arith.constant 3 : index
    %142 = memref.load %arg5[%c3] : memref<24xf32, #tpu.memory_space<smem>>
    %143 = vector.broadcast %142 : f32 to vector<1x16xf32>
    %144 = arith.mulf %143, %17 : vector<1x16xf32>
    %c3_24 = arith.constant 3 : index
    %145 = memref.load %arg6[%c3_24] : memref<24xf32, #tpu.memory_space<smem>>
    %146 = vector.broadcast %145 : f32 to vector<1x16xf32>
    %147 = arith.mulf %146, %25 : vector<1x16xf32>
    %c9 = arith.constant 9 : index
    %148 = memref.load %arg5[%c9] : memref<24xf32, #tpu.memory_space<smem>>
    %149 = vector.broadcast %148 : f32 to vector<1x16xf32>
    %150 = arith.mulf %149, %19 : vector<1x16xf32>
    %151 = arith.addf %144, %150 : vector<1x16xf32>
    %c9_25 = arith.constant 9 : index
    %152 = memref.load %arg6[%c9_25] : memref<24xf32, #tpu.memory_space<smem>>
    %153 = vector.broadcast %152 : f32 to vector<1x16xf32>
    %154 = arith.mulf %153, %27 : vector<1x16xf32>
    %155 = arith.addf %147, %154 : vector<1x16xf32>
    %c15 = arith.constant 15 : index
    %156 = memref.load %arg5[%c15] : memref<24xf32, #tpu.memory_space<smem>>
    %157 = vector.broadcast %156 : f32 to vector<1x16xf32>
    %158 = arith.mulf %157, %21 : vector<1x16xf32>
    %159 = arith.addf %151, %158 : vector<1x16xf32>
    %c15_26 = arith.constant 15 : index
    %160 = memref.load %arg6[%c15_26] : memref<24xf32, #tpu.memory_space<smem>>
    %161 = vector.broadcast %160 : f32 to vector<1x16xf32>
    %162 = arith.mulf %161, %29 : vector<1x16xf32>
    %163 = arith.addf %155, %162 : vector<1x16xf32>
    %c21 = arith.constant 21 : index
    %164 = memref.load %arg5[%c21] : memref<24xf32, #tpu.memory_space<smem>>
    %165 = vector.broadcast %164 : f32 to vector<1x16xf32>
    %166 = arith.mulf %165, %23 : vector<1x16xf32>
    %167 = arith.addf %159, %166 : vector<1x16xf32>
    %c21_27 = arith.constant 21 : index
    %168 = memref.load %arg6[%c21_27] : memref<24xf32, #tpu.memory_space<smem>>
    %169 = vector.broadcast %168 : f32 to vector<1x16xf32>
    %170 = arith.mulf %169, %31 : vector<1x16xf32>
    %171 = arith.addf %163, %170 : vector<1x16xf32>
    %172 = arith.mulf %7, %167 : vector<1x16xf32>
    %173 = arith.mulf %13, %171 : vector<1x16xf32>
    %174 = arith.subf %172, %173 : vector<1x16xf32>
    %175 = arith.mulf %13, %167 : vector<1x16xf32>
    %176 = arith.mulf %7, %171 : vector<1x16xf32>
    %177 = arith.addf %175, %176 : vector<1x16xf32>
    %178 = arith.addf %100, %174 : vector<1x16xf32>
    %179 = arith.addf %103, %177 : vector<1x16xf32>
    %c4 = arith.constant 4 : index
    %180 = memref.load %arg5[%c4] : memref<24xf32, #tpu.memory_space<smem>>
    %181 = vector.broadcast %180 : f32 to vector<1x16xf32>
    %182 = arith.mulf %181, %17 : vector<1x16xf32>
    %c4_28 = arith.constant 4 : index
    %183 = memref.load %arg6[%c4_28] : memref<24xf32, #tpu.memory_space<smem>>
    %184 = vector.broadcast %183 : f32 to vector<1x16xf32>
    %185 = arith.mulf %184, %25 : vector<1x16xf32>
    %c10 = arith.constant 10 : index
    %186 = memref.load %arg5[%c10] : memref<24xf32, #tpu.memory_space<smem>>
    %187 = vector.broadcast %186 : f32 to vector<1x16xf32>
    %188 = arith.mulf %187, %19 : vector<1x16xf32>
    %189 = arith.addf %182, %188 : vector<1x16xf32>
    %c10_29 = arith.constant 10 : index
    %190 = memref.load %arg6[%c10_29] : memref<24xf32, #tpu.memory_space<smem>>
    %191 = vector.broadcast %190 : f32 to vector<1x16xf32>
    %192 = arith.mulf %191, %27 : vector<1x16xf32>
    %193 = arith.addf %185, %192 : vector<1x16xf32>
    %c16 = arith.constant 16 : index
    %194 = memref.load %arg5[%c16] : memref<24xf32, #tpu.memory_space<smem>>
    %195 = vector.broadcast %194 : f32 to vector<1x16xf32>
    %196 = arith.mulf %195, %21 : vector<1x16xf32>
    %197 = arith.addf %189, %196 : vector<1x16xf32>
    %c16_30 = arith.constant 16 : index
    %198 = memref.load %arg6[%c16_30] : memref<24xf32, #tpu.memory_space<smem>>
    %199 = vector.broadcast %198 : f32 to vector<1x16xf32>
    %200 = arith.mulf %199, %29 : vector<1x16xf32>
    %201 = arith.addf %193, %200 : vector<1x16xf32>
    %c22 = arith.constant 22 : index
    %202 = memref.load %arg5[%c22] : memref<24xf32, #tpu.memory_space<smem>>
    %203 = vector.broadcast %202 : f32 to vector<1x16xf32>
    %204 = arith.mulf %203, %23 : vector<1x16xf32>
    %205 = arith.addf %197, %204 : vector<1x16xf32>
    %c22_31 = arith.constant 22 : index
    %206 = memref.load %arg6[%c22_31] : memref<24xf32, #tpu.memory_space<smem>>
    %207 = vector.broadcast %206 : f32 to vector<1x16xf32>
    %208 = arith.mulf %207, %31 : vector<1x16xf32>
    %209 = arith.addf %201, %208 : vector<1x16xf32>
    %210 = arith.mulf %9, %205 : vector<1x16xf32>
    %211 = arith.mulf %15, %209 : vector<1x16xf32>
    %212 = arith.subf %210, %211 : vector<1x16xf32>
    %213 = arith.mulf %15, %205 : vector<1x16xf32>
    %214 = arith.mulf %9, %209 : vector<1x16xf32>
    %215 = arith.addf %213, %214 : vector<1x16xf32>
    %216 = arith.addf %140, %212 : vector<1x16xf32>
    %217 = arith.addf %141, %215 : vector<1x16xf32>
    %c5 = arith.constant 5 : index
    %218 = memref.load %arg5[%c5] : memref<24xf32, #tpu.memory_space<smem>>
    %219 = vector.broadcast %218 : f32 to vector<1x16xf32>
    %220 = arith.mulf %219, %17 : vector<1x16xf32>
    %c5_32 = arith.constant 5 : index
    %221 = memref.load %arg6[%c5_32] : memref<24xf32, #tpu.memory_space<smem>>
    %222 = vector.broadcast %221 : f32 to vector<1x16xf32>
    %223 = arith.mulf %222, %25 : vector<1x16xf32>
    %c11 = arith.constant 11 : index
    %224 = memref.load %arg5[%c11] : memref<24xf32, #tpu.memory_space<smem>>
    %225 = vector.broadcast %224 : f32 to vector<1x16xf32>
    %226 = arith.mulf %225, %19 : vector<1x16xf32>
    %227 = arith.addf %220, %226 : vector<1x16xf32>
    %c11_33 = arith.constant 11 : index
    %228 = memref.load %arg6[%c11_33] : memref<24xf32, #tpu.memory_space<smem>>
    %229 = vector.broadcast %228 : f32 to vector<1x16xf32>
    %230 = arith.mulf %229, %27 : vector<1x16xf32>
    %231 = arith.addf %223, %230 : vector<1x16xf32>
    %c17 = arith.constant 17 : index
    %232 = memref.load %arg5[%c17] : memref<24xf32, #tpu.memory_space<smem>>
    %233 = vector.broadcast %232 : f32 to vector<1x16xf32>
    %234 = arith.mulf %233, %21 : vector<1x16xf32>
    %235 = arith.addf %227, %234 : vector<1x16xf32>
    %c17_34 = arith.constant 17 : index
    %236 = memref.load %arg6[%c17_34] : memref<24xf32, #tpu.memory_space<smem>>
    %237 = vector.broadcast %236 : f32 to vector<1x16xf32>
    %238 = arith.mulf %237, %29 : vector<1x16xf32>
    %239 = arith.addf %231, %238 : vector<1x16xf32>
    %c23 = arith.constant 23 : index
    %240 = memref.load %arg5[%c23] : memref<24xf32, #tpu.memory_space<smem>>
    %241 = vector.broadcast %240 : f32 to vector<1x16xf32>
    %242 = arith.mulf %241, %23 : vector<1x16xf32>
    %243 = arith.addf %235, %242 : vector<1x16xf32>
    %c23_35 = arith.constant 23 : index
    %244 = memref.load %arg6[%c23_35] : memref<24xf32, #tpu.memory_space<smem>>
    %245 = vector.broadcast %244 : f32 to vector<1x16xf32>
    %246 = arith.mulf %245, %31 : vector<1x16xf32>
    %247 = arith.addf %239, %246 : vector<1x16xf32>
    %248 = arith.mulf %9, %243 : vector<1x16xf32>
    %249 = arith.mulf %15, %247 : vector<1x16xf32>
    %250 = arith.subf %248, %249 : vector<1x16xf32>
    %251 = arith.mulf %15, %243 : vector<1x16xf32>
    %252 = arith.mulf %9, %247 : vector<1x16xf32>
    %253 = arith.addf %251, %252 : vector<1x16xf32>
    %254 = arith.addf %178, %250 : vector<1x16xf32>
    %255 = arith.addf %179, %253 : vector<1x16xf32>
    %c0_36 = arith.constant 0 : index
    %256 = memref.load %arg7[%c0_36] : memref<12xf32, #tpu.memory_space<smem>>
    %257 = vector.broadcast %256 : f32 to vector<1x16xf32>
    %258 = arith.mulf %257, %216 : vector<1x16xf32>
    %c0_37 = arith.constant 0 : index
    %259 = memref.load %arg8[%c0_37] : memref<12xf32, #tpu.memory_space<smem>>
    %260 = vector.broadcast %259 : f32 to vector<1x16xf32>
    %261 = arith.mulf %260, %217 : vector<1x16xf32>
    %c6_38 = arith.constant 6 : index
    %262 = memref.load %arg7[%c6_38] : memref<12xf32, #tpu.memory_space<smem>>
    %263 = vector.broadcast %262 : f32 to vector<1x16xf32>
    %264 = arith.mulf %263, %254 : vector<1x16xf32>
    %265 = arith.addf %258, %264 : vector<1x16xf32>
    %c6_39 = arith.constant 6 : index
    %266 = memref.load %arg8[%c6_39] : memref<12xf32, #tpu.memory_space<smem>>
    %267 = vector.broadcast %266 : f32 to vector<1x16xf32>
    %268 = arith.mulf %267, %255 : vector<1x16xf32>
    %269 = arith.addf %261, %268 : vector<1x16xf32>
    %270 = arith.mulf %5, %265 : vector<1x16xf32>
    %271 = arith.mulf %11, %269 : vector<1x16xf32>
    %272 = arith.subf %270, %271 : vector<1x16xf32>
    %273 = arith.mulf %11, %265 : vector<1x16xf32>
    %274 = arith.mulf %5, %269 : vector<1x16xf32>
    %275 = arith.addf %273, %274 : vector<1x16xf32>
    %c1_40 = arith.constant 1 : index
    %276 = memref.load %arg7[%c1_40] : memref<12xf32, #tpu.memory_space<smem>>
    %277 = vector.broadcast %276 : f32 to vector<1x16xf32>
    %278 = arith.mulf %277, %216 : vector<1x16xf32>
    %c1_41 = arith.constant 1 : index
    %279 = memref.load %arg8[%c1_41] : memref<12xf32, #tpu.memory_space<smem>>
    %280 = vector.broadcast %279 : f32 to vector<1x16xf32>
    %281 = arith.mulf %280, %217 : vector<1x16xf32>
    %c7_42 = arith.constant 7 : index
    %282 = memref.load %arg7[%c7_42] : memref<12xf32, #tpu.memory_space<smem>>
    %283 = vector.broadcast %282 : f32 to vector<1x16xf32>
    %284 = arith.mulf %283, %254 : vector<1x16xf32>
    %285 = arith.addf %278, %284 : vector<1x16xf32>
    %c7_43 = arith.constant 7 : index
    %286 = memref.load %arg8[%c7_43] : memref<12xf32, #tpu.memory_space<smem>>
    %287 = vector.broadcast %286 : f32 to vector<1x16xf32>
    %288 = arith.mulf %287, %255 : vector<1x16xf32>
    %289 = arith.addf %281, %288 : vector<1x16xf32>
    %290 = arith.mulf %5, %285 : vector<1x16xf32>
    %291 = arith.mulf %11, %289 : vector<1x16xf32>
    %292 = arith.subf %290, %291 : vector<1x16xf32>
    %293 = arith.mulf %11, %285 : vector<1x16xf32>
    %294 = arith.mulf %5, %289 : vector<1x16xf32>
    %295 = arith.addf %293, %294 : vector<1x16xf32>
    %c2_44 = arith.constant 2 : index
    %296 = memref.load %arg7[%c2_44] : memref<12xf32, #tpu.memory_space<smem>>
    %297 = vector.broadcast %296 : f32 to vector<1x16xf32>
    %298 = arith.mulf %297, %216 : vector<1x16xf32>
    %c2_45 = arith.constant 2 : index
    %299 = memref.load %arg8[%c2_45] : memref<12xf32, #tpu.memory_space<smem>>
    %300 = vector.broadcast %299 : f32 to vector<1x16xf32>
    %301 = arith.mulf %300, %217 : vector<1x16xf32>
    %c8_46 = arith.constant 8 : index
    %302 = memref.load %arg7[%c8_46] : memref<12xf32, #tpu.memory_space<smem>>
    %303 = vector.broadcast %302 : f32 to vector<1x16xf32>
    %304 = arith.mulf %303, %254 : vector<1x16xf32>
    %305 = arith.addf %298, %304 : vector<1x16xf32>
    %c8_47 = arith.constant 8 : index
    %306 = memref.load %arg8[%c8_47] : memref<12xf32, #tpu.memory_space<smem>>
    %307 = vector.broadcast %306 : f32 to vector<1x16xf32>
    %308 = arith.mulf %307, %255 : vector<1x16xf32>
    %309 = arith.addf %301, %308 : vector<1x16xf32>
    %310 = arith.mulf %7, %305 : vector<1x16xf32>
    %311 = arith.mulf %13, %309 : vector<1x16xf32>
    %312 = arith.subf %310, %311 : vector<1x16xf32>
    %313 = arith.mulf %13, %305 : vector<1x16xf32>
    %314 = arith.mulf %7, %309 : vector<1x16xf32>
    %315 = arith.addf %313, %314 : vector<1x16xf32>
    %316 = arith.addf %272, %312 : vector<1x16xf32>
    %317 = arith.addf %275, %315 : vector<1x16xf32>
    %c3_48 = arith.constant 3 : index
    %318 = memref.load %arg7[%c3_48] : memref<12xf32, #tpu.memory_space<smem>>
    %319 = vector.broadcast %318 : f32 to vector<1x16xf32>
    %320 = arith.mulf %319, %216 : vector<1x16xf32>
    %c3_49 = arith.constant 3 : index
    %321 = memref.load %arg8[%c3_49] : memref<12xf32, #tpu.memory_space<smem>>
    %322 = vector.broadcast %321 : f32 to vector<1x16xf32>
    %323 = arith.mulf %322, %217 : vector<1x16xf32>
    %c9_50 = arith.constant 9 : index
    %324 = memref.load %arg7[%c9_50] : memref<12xf32, #tpu.memory_space<smem>>
    %325 = vector.broadcast %324 : f32 to vector<1x16xf32>
    %326 = arith.mulf %325, %254 : vector<1x16xf32>
    %327 = arith.addf %320, %326 : vector<1x16xf32>
    %c9_51 = arith.constant 9 : index
    %328 = memref.load %arg8[%c9_51] : memref<12xf32, #tpu.memory_space<smem>>
    %329 = vector.broadcast %328 : f32 to vector<1x16xf32>
    %330 = arith.mulf %329, %255 : vector<1x16xf32>
    %331 = arith.addf %323, %330 : vector<1x16xf32>
    %332 = arith.mulf %7, %327 : vector<1x16xf32>
    %333 = arith.mulf %13, %331 : vector<1x16xf32>
    %334 = arith.subf %332, %333 : vector<1x16xf32>
    %335 = arith.mulf %13, %327 : vector<1x16xf32>
    %336 = arith.mulf %7, %331 : vector<1x16xf32>
    %337 = arith.addf %335, %336 : vector<1x16xf32>
    %338 = arith.addf %292, %334 : vector<1x16xf32>
    %339 = arith.addf %295, %337 : vector<1x16xf32>
    %c4_52 = arith.constant 4 : index
    %340 = memref.load %arg7[%c4_52] : memref<12xf32, #tpu.memory_space<smem>>
    %341 = vector.broadcast %340 : f32 to vector<1x16xf32>
    %342 = arith.mulf %341, %216 : vector<1x16xf32>
    %c4_53 = arith.constant 4 : index
    %343 = memref.load %arg8[%c4_53] : memref<12xf32, #tpu.memory_space<smem>>
    %344 = vector.broadcast %343 : f32 to vector<1x16xf32>
    %345 = arith.mulf %344, %217 : vector<1x16xf32>
    %c10_54 = arith.constant 10 : index
    %346 = memref.load %arg7[%c10_54] : memref<12xf32, #tpu.memory_space<smem>>
    %347 = vector.broadcast %346 : f32 to vector<1x16xf32>
    %348 = arith.mulf %347, %254 : vector<1x16xf32>
    %349 = arith.addf %342, %348 : vector<1x16xf32>
    %c10_55 = arith.constant 10 : index
    %350 = memref.load %arg8[%c10_55] : memref<12xf32, #tpu.memory_space<smem>>
    %351 = vector.broadcast %350 : f32 to vector<1x16xf32>
    %352 = arith.mulf %351, %255 : vector<1x16xf32>
    %353 = arith.addf %345, %352 : vector<1x16xf32>
    %354 = arith.mulf %9, %349 : vector<1x16xf32>
    %355 = arith.mulf %15, %353 : vector<1x16xf32>
    %356 = arith.subf %354, %355 : vector<1x16xf32>
    %357 = arith.mulf %15, %349 : vector<1x16xf32>
    %358 = arith.mulf %9, %353 : vector<1x16xf32>
    %359 = arith.addf %357, %358 : vector<1x16xf32>
    %360 = arith.addf %316, %356 : vector<1x16xf32>
    %361 = arith.addf %317, %359 : vector<1x16xf32>
    %c5_56 = arith.constant 5 : index
    %362 = memref.load %arg7[%c5_56] : memref<12xf32, #tpu.memory_space<smem>>
    %363 = vector.broadcast %362 : f32 to vector<1x16xf32>
    %364 = arith.mulf %363, %216 : vector<1x16xf32>
    %c5_57 = arith.constant 5 : index
    %365 = memref.load %arg8[%c5_57] : memref<12xf32, #tpu.memory_space<smem>>
    %366 = vector.broadcast %365 : f32 to vector<1x16xf32>
    %367 = arith.mulf %366, %217 : vector<1x16xf32>
    %c11_58 = arith.constant 11 : index
    %368 = memref.load %arg7[%c11_58] : memref<12xf32, #tpu.memory_space<smem>>
    %369 = vector.broadcast %368 : f32 to vector<1x16xf32>
    %370 = arith.mulf %369, %254 : vector<1x16xf32>
    %371 = arith.addf %364, %370 : vector<1x16xf32>
    %c11_59 = arith.constant 11 : index
    %372 = memref.load %arg8[%c11_59] : memref<12xf32, #tpu.memory_space<smem>>
    %373 = vector.broadcast %372 : f32 to vector<1x16xf32>
    %374 = arith.mulf %373, %255 : vector<1x16xf32>
    %375 = arith.addf %367, %374 : vector<1x16xf32>
    %376 = arith.mulf %9, %371 : vector<1x16xf32>
    %377 = arith.mulf %15, %375 : vector<1x16xf32>
    %378 = arith.subf %376, %377 : vector<1x16xf32>
    %379 = arith.mulf %15, %371 : vector<1x16xf32>
    %380 = arith.mulf %9, %375 : vector<1x16xf32>
    %381 = arith.addf %379, %380 : vector<1x16xf32>
    %382 = arith.addf %338, %378 : vector<1x16xf32>
    %383 = arith.addf %339, %381 : vector<1x16xf32>
    %cst = arith.constant 0.000000e+00 : f32
    %384 = vector.broadcast %cst : f32 to vector<1x16xf32>
    %385 = arith.cmpf oge, %360, %384 : vector<1x16xf32>
    %cst_60 = arith.constant 0.000000e+00 : f32
    %386 = vector.broadcast %cst_60 : f32 to vector<1x16xf32>
    %387 = arith.select %385, %360, %386 : vector<1x16xi1>, vector<1x16xf32>
    %cst_61 = arith.constant 0.000000e+00 : f32
    %388 = vector.broadcast %cst_61 : f32 to vector<1x16xf32>
    %389 = arith.select %385, %361, %388 : vector<1x16xi1>, vector<1x16xf32>
    %cst_62 = arith.constant dense<0.000000e+00> : vector<1xf32>
    %390 = vector.multi_reduction <add>, %387, %cst_62 [1] : vector<1x16xf32> to vector<1xf32>
    %391 = vector.shape_cast %390 : vector<1xf32> to vector<1x1xf32>
    %cst_63 = arith.constant 1.600000e+01 : f32
    %392 = vector.broadcast %cst_63 : f32 to vector<1x1xf32>
    %393 = arith.divf %391, %392 : vector<1x1xf32>
    %cst_64 = arith.constant dense<0.000000e+00> : vector<1xf32>
    %394 = vector.multi_reduction <add>, %389, %cst_64 [1] : vector<1x16xf32> to vector<1xf32>
    %395 = vector.shape_cast %394 : vector<1xf32> to vector<1x1xf32>
    %cst_65 = arith.constant 1.600000e+01 : f32
    %396 = vector.broadcast %cst_65 : f32 to vector<1x1xf32>
    %397 = arith.divf %395, %396 : vector<1x1xf32>
    %cst_66 = arith.constant 0.000000e+00 : f32
    %398 = vector.broadcast %cst_66 : f32 to vector<1x16xf32>
    %399 = arith.cmpf oge, %382, %398 : vector<1x16xf32>
    %cst_67 = arith.constant 0.000000e+00 : f32
    %400 = vector.broadcast %cst_67 : f32 to vector<1x16xf32>
    %401 = arith.select %399, %382, %400 : vector<1x16xi1>, vector<1x16xf32>
    %cst_68 = arith.constant 0.000000e+00 : f32
    %402 = vector.broadcast %cst_68 : f32 to vector<1x16xf32>
    %403 = arith.select %399, %383, %402 : vector<1x16xi1>, vector<1x16xf32>
    %cst_69 = arith.constant dense<0.000000e+00> : vector<1xf32>
    %404 = vector.multi_reduction <add>, %401, %cst_69 [1] : vector<1x16xf32> to vector<1xf32>
    %405 = vector.shape_cast %404 : vector<1xf32> to vector<1x1xf32>
    %cst_70 = arith.constant 1.600000e+01 : f32
    %406 = vector.broadcast %cst_70 : f32 to vector<1x1xf32>
    %407 = arith.divf %405, %406 : vector<1x1xf32>
    %cst_71 = arith.constant dense<0.000000e+00> : vector<1xf32>
    %408 = vector.multi_reduction <add>, %403, %cst_71 [1] : vector<1x16xf32> to vector<1xf32>
    %409 = vector.shape_cast %408 : vector<1xf32> to vector<1x1xf32>
    %cst_72 = arith.constant 1.600000e+01 : f32
    %410 = vector.broadcast %cst_72 : f32 to vector<1x1xf32>
    %411 = arith.divf %409, %410 : vector<1x1xf32>
    %c0_73 = arith.constant 0 : index
    %412 = memref.load %arg9[%c0_73] : memref<8xf32, #tpu.memory_space<smem>>
    %413 = vector.broadcast %412 : f32 to vector<1x1xf32>
    %414 = arith.mulf %393, %413 : vector<1x1xf32>
    %c4_74 = arith.constant 4 : index
    %415 = memref.load %arg9[%c4_74] : memref<8xf32, #tpu.memory_space<smem>>
    %416 = vector.broadcast %415 : f32 to vector<1x1xf32>
    %417 = arith.mulf %397, %416 : vector<1x1xf32>
    %418 = arith.addf %414, %417 : vector<1x1xf32>
    %c2_75 = arith.constant 2 : index
    %419 = memref.load %arg9[%c2_75] : memref<8xf32, #tpu.memory_space<smem>>
    %420 = vector.broadcast %419 : f32 to vector<1x1xf32>
    %421 = arith.mulf %407, %420 : vector<1x1xf32>
    %422 = arith.addf %418, %421 : vector<1x1xf32>
    %c6_76 = arith.constant 6 : index
    %423 = memref.load %arg9[%c6_76] : memref<8xf32, #tpu.memory_space<smem>>
    %424 = vector.broadcast %423 : f32 to vector<1x1xf32>
    %425 = arith.mulf %411, %424 : vector<1x1xf32>
    %426 = arith.addf %422, %425 : vector<1x1xf32>
    %c0_77 = arith.constant 0 : index
    %427 = memref.load %arg10[%c0_77] : memref<2xf32, #tpu.memory_space<smem>>
    %428 = vector.broadcast %427 : f32 to vector<1x1xf32>
    %429 = arith.addf %426, %428 : vector<1x1xf32>
    %c1_78 = arith.constant 1 : index
    %430 = memref.load %arg9[%c1_78] : memref<8xf32, #tpu.memory_space<smem>>
    %431 = vector.broadcast %430 : f32 to vector<1x1xf32>
    %432 = arith.mulf %393, %431 : vector<1x1xf32>
    %c5_79 = arith.constant 5 : index
    %433 = memref.load %arg9[%c5_79] : memref<8xf32, #tpu.memory_space<smem>>
    %434 = vector.broadcast %433 : f32 to vector<1x1xf32>
    %435 = arith.mulf %397, %434 : vector<1x1xf32>
    %436 = arith.addf %432, %435 : vector<1x1xf32>
    %c3_80 = arith.constant 3 : index
    %437 = memref.load %arg9[%c3_80] : memref<8xf32, #tpu.memory_space<smem>>
    %438 = vector.broadcast %437 : f32 to vector<1x1xf32>
    %439 = arith.mulf %407, %438 : vector<1x1xf32>
    %440 = arith.addf %436, %439 : vector<1x1xf32>
    %c7_81 = arith.constant 7 : index
    %441 = memref.load %arg9[%c7_81] : memref<8xf32, #tpu.memory_space<smem>>
    %442 = vector.broadcast %441 : f32 to vector<1x1xf32>
    %443 = arith.mulf %411, %442 : vector<1x1xf32>
    %444 = arith.addf %440, %443 : vector<1x1xf32>
    %c1_82 = arith.constant 1 : index
    %445 = memref.load %arg10[%c1_82] : memref<2xf32, #tpu.memory_space<smem>>
    %446 = vector.broadcast %445 : f32 to vector<1x1xf32>
    %447 = arith.addf %444, %446 : vector<1x1xf32>
    %448 = vector.shape_cast %429 : vector<1x1xf32> to vector<1x1x1xf32>
    %449 = vector.shape_cast %447 : vector<1x1xf32> to vector<1x1x1xf32>
    %450 = tpu.concatenate %448, %449 in 2 : vector<1x1x1xf32>, vector<1x1x1xf32> -> vector<1x1x2xf32>
    %c0_83 = arith.constant 0 : index
    %c0_84 = arith.constant 0 : index
    %c0_85 = arith.constant 0 : index
    %451 = vector.load %arg11[%c0_83, %c0_84, %c0_85] : memref<1x1x2xf32, #tpu.memory_space<vmem>>, vector<1x1x2xf32>
    tpu.vector_store %arg11[%c0_83, %c0_84, %c0_85], %450 {strides = array<i32>} : memref<1x1x2xf32, #tpu.memory_space<vmem>>, vector<1x1x2xf32>,
    return
  }
  func.func @transform_0(%arg0: i32) -> (i32, i32, i32) {
    %c0_i32 = arith.constant 0 : i32
    %c0_i32_0 = arith.constant 0 : i32
    %c0_i32_1 = arith.constant 0 : i32
    return %arg0, %c0_i32, %c0_i32_0 : i32, i32, i32
  }
  func.func @transform_1(%arg0: i32) -> (i32, i32, i32) {
    %c0_i32 = arith.constant 0 : i32
    %c0_i32_0 = arith.constant 0 : i32
    %c0_i32_1 = arith.constant 0 : i32
    return %arg0, %c0_i32, %c0_i32_0 : i32, i32, i32
  }
  func.func @transform_2(%arg0: i32) -> (i32, i32, i32) {
    %c0_i32 = arith.constant 0 : i32
    %c0_i32_0 = arith.constant 0 : i32
    %c0_i32_1 = arith.constant 0 : i32
    return %arg0, %c0_i32, %c0_i32_0 : i32, i32, i32
  }
  func.func @transform_3(%arg0: i32) -> (i32, i32, i32) {
    %c0_i32 = arith.constant 0 : i32
    %c0_i32_0 = arith.constant 0 : i32
    %c0_i32_1 = arith.constant 0 : i32
    return %arg0, %c0_i32, %c0_i32_0 : i32, i32, i32
  }
  func.func @transform_4(%arg0: i32) -> i32 {
    %c0_i32 = arith.constant 0 : i32
    %c0_i32_0 = arith.constant 0 : i32
    return %c0_i32 : i32
  }
  func.func @transform_5(%arg0: i32) -> i32 {
    %c0_i32 = arith.constant 0 : i32
    %c0_i32_0 = arith.constant 0 : i32
    return %c0_i32 : i32
  }
  func.func @transform_6(%arg0: i32) -> i32 {
    %c0_i32 = arith.constant 0 : i32
    %c0_i32_0 = arith.constant 0 : i32
    return %c0_i32 : i32
  }
  func.func @transform_7(%arg0: i32) -> i32 {
    %c0_i32 = arith.constant 0 : i32
    %c0_i32_0 = arith.constant 0 : i32
    return %c0_i32 : i32
  }
  func.func @transform_8(%arg0: i32) -> i32 {
    %c0_i32 = arith.constant 0 : i32
    %c0_i32_0 = arith.constant 0 : i32
    return %c0_i32 : i32
  }
  func.func @transform_9(%arg0: i32) -> i32 {
    %c0_i32 = arith.constant 0 : i32
    %c0_i32_0 = arith.constant 0 : i32
    return %c0_i32 : i32
  }
  func.func @transform_10(%arg0: i32) -> (i32, i32, i32) {
    %c0_i32 = arith.constant 0 : i32
    %c0_i32_0 = arith.constant 0 : i32
    %c0_i32_1 = arith.constant 0 : i32
    return %arg0, %c0_i32, %c0_i32_0 : i32, i32, i32
  }
}

</mosaic_0001>

<llo_original>
// kernel: tpu_custom_call.1
$region0: #{tpu_custom_call.1}
  #allocation0 [shape = 'u32[]', space=smem, size = 0x4, offset = 0x4, fixed_abs, tag = 'smem constant byte address 0x4 - core index']
  #allocation1 [shape = 'u32[72,128]{1,0:T(1,128)}', space=vmem, size = 0x9000, scoped, tag = 'internal scratch']
  %s0 = inlined_call_operand.vmem [shape: f32[2,3,16], index: 0, kind: input, shape index: {}]
  %s1 = inlined_call_operand.vmem [shape: f32[2,3,16], index: 1, kind: input, shape index: {}]
  %s2 = inlined_call_operand.vmem [shape: f32[2,4,16], index: 2, kind: input, shape index: {}]
  %s3 = inlined_call_operand.vmem [shape: f32[2,4,16], index: 3, kind: input, shape index: {}]
  %s4 = inlined_call_operand.vmem [shape: f32[24], index: 4, kind: input, shape index: {}]
  %s5 = inlined_call_operand.vmem [shape: f32[24], index: 5, kind: input, shape index: {}]
  %s6 = inlined_call_operand.vmem [shape: f32[12], index: 6, kind: input, shape index: {}]
  %s7 = inlined_call_operand.vmem [shape: f32[12], index: 7, kind: input, shape index: {}]
  %s8 = inlined_call_operand.vmem [shape: f32[8], index: 8, kind: input, shape index: {}]
  %s9 = inlined_call_operand.vmem [shape: f32[2], index: 9, kind: input, shape index: {}]
  %s10 = inlined_call_operand.hbm [shape: f32[2,1,2], index: 10, kind: output, shape index: {}]
  %s11 = sld [smem:[#allocation0]]
  $region97: #{tpu_custom_call.1} parent=0
    _
  %s13 = ssub.s32 1, %s11
  %s14 = scalar_select 0, %s13, %s11
  $region1: #{tpu_custom_call.1} parent=0
    #allocation2 [shape = 'u8[512]{0}', space=smem, size = 0x200, scoped, tag = 'input window, operand 4, single buffered']
    #allocation3 [shape = 's32[2]{0}', space=sflag, size = 0x8, scoped, tag = 'scoped memory for tpu_custom_call.1']
    #allocation4 [shape = 's32[2]{0}', space=sflag, size = 0x8, scoped, tag = 'scoped memory for tpu_custom_call.1']
    #allocation5 [shape = 'u8[512]{0}', space=smem, size = 0x200, scoped, tag = 'input window, operand 5, single buffered']
    #allocation6 [shape = 's32[1]{0}', space=sflag, size = 0x4, scoped, tag = 'scoped memory for tpu_custom_call.1']
    #allocation7 [shape = 'u8[512]{0}', space=smem, size = 0x200, scoped, tag = 'input window, operand 6, single buffered']
    #allocation8 [shape = 'u8[512]{0}', space=smem, size = 0x200, scoped, tag = 'input window, operand 7, single buffered']
    #allocation9 [shape = 's32[1]{0}', space=sflag, size = 0x4, scoped, tag = 'scoped memory for tpu_custom_call.1']
    #allocation10 [shape = 'u8[512]{0}', space=smem, size = 0x200, scoped, tag = 'input window, operand 8, single buffered']
    #allocation11 [shape = 'u8[512]{0}', space=smem, size = 0x200, scoped, tag = 'input window, operand 9, single buffered']
    #allocation12 [shape = 's32[1]{0}', space=sflag, size = 0x4, scoped, tag = 'scoped memory for tpu_custom_call.1']
    #allocation13 [shape = 'u8[1024]{0}', space=vmem, size = 0x400, scoped, tag = 'output window, operand 0']
    %15 = vsyncpa [#allocation4], 0
    %16 = vsyncpa [#allocation6], 0
    %17 = vsyncpa [#allocation9], 0
    %18 = vsyncpa [#allocation12], 0
    %19 = vsyncpa [#allocation3], 0
    %s20 = scalar_lea.sflag [#allocation3], 1
    %21 = vsyncpa %s20, 0
    loop: start=0, step=1, limit=4
    $region2: #{tpu_custom_call.1} parent=1 // loop_pre_header
      _
    $region3: #{tpu_custom_call.1} parent=1 // loop_header
      %s23 = sphi 0, %s27
      %p24 = scmp.ge.s32.totalorder %s23, 4
      %s33 = sphi 0, %s35
      %s36 = sphi 0, %s33
      %s37 = sphi 0, %s36
      %s53 = sphi 0, %s37
      %s59 = sphi 0, %s61
      %s62 = sphi 0, %s59
      %s63 = sphi 0, %s62
      %s79 = sphi 0, %s63
      %s85 = sphi 0, %s87
      %s88 = sphi 0, %s85
      %s89 = sphi 0, %s88
      %s105 = sphi 0, %s89
      %s111 = sphi 0, %s113
      %s114 = sphi 0, %s111
      %s115 = sphi 0, %s114
      %s131 = sphi 0, %s115
      %s135 = sphi 0, %s135
      %s137 = sphi 0, %s135
      %s138 = sphi 0, %s137
      %s152 = sphi 0, %s138
      %s156 = sphi 0, %s156
      %s158 = sphi 0, %s156
      %s159 = sphi 0, %s158
      %s173 = sphi 0, %s159
      %s177 = sphi 0, %s177
      %s179 = sphi 0, %s177
      %s180 = sphi 0, %s179
      %s194 = sphi 0, %s180
      %s198 = sphi 0, %s198
      %s200 = sphi 0, %s198
      %s201 = sphi 0, %s200
      %s215 = sphi 0, %s201
      %s219 = sphi 0, %s219
      %s221 = sphi 0, %s219
      %s222 = sphi 0, %s221
      %s236 = sphi 0, %s222
      %s240 = sphi 0, %s240
      %s242 = sphi 0, %s240
      %s243 = sphi 0, %s242
      %s257 = sphi 0, %s243
      %s263 = sphi 0, %s265
      %s266 = sphi 0, %s263
      %s267 = sphi 0, %s266
      %s283 = sphi 0, %s267
    $region4: #{tpu_custom_call.1} parent=1 // loop_header_branch
      %26 = sbr.rel (%p24) target = $region8
    $region5: #{tpu_custom_call.1} parent=1 // loop_body
      %s28 = ssub.s32 %s23, 1
      %s29 = ssub.s32 %s23, 2
      %s30 = sadd.s32 %s23, 1
      %s31 = ssub.s32 %s23, %s30
      %p32 = scmp.eq.s32.totalorder %s31, 0
      %s34 = sadd.s32 %s33, 1
      %s35 = scalar_select %p32, %s33, %s34
      %p38 = pneg %p32
      %p39 = scmp.eq.s32.totalorder %s23, 1
      %p40 = por %p38, %p39
      %p41 = scmp.ne.s32.totalorder %s33, %s36
      %p42 = scmp.eq.s32.totalorder %s23, 0
      %p43 = por %p41, %p42
      %p44 = scmp.ne.s32.totalorder %s33, %s36
      %p45 = scmp.eq.s32.totalorder %s28, 1
      %p46 = por %p44, %p45
      %p47 = scmp.ne.s32.totalorder %s36, %s37
      %p48 = scmp.eq.s32.totalorder %s28, 0
      %p49 = por %p47, %p48
      %p50 = scmp.ne.s32.totalorder %s36, %s37
      %p51 = scmp.eq.s32.totalorder %s29, 1
      %p52 = por %p50, %p51
      %p54 = scmp.ne.s32.totalorder %s37, %s53
      %p55 = scmp.eq.s32.totalorder %s29, 0
      %p56 = por %p54, %p55
      %s57 = ssub.s32 %s23, %s30
      %p58 = scmp.eq.s32.totalorder %s57, 0
      %s60 = sadd.s32 %s59, 1
      %s61 = scalar_select %p58, %s59, %s60
      %p64 = pneg %p58
      %p65 = scmp.eq.s32.totalorder %s23, 1
      %p66 = por %p64, %p65
      %p67 = scmp.ne.s32.totalorder %s59, %s62
      %p68 = scmp.eq.s32.totalorder %s23, 0
      %p69 = por %p67, %p68
      %p70 = scmp.ne.s32.totalorder %s59, %s62
      %p71 = scmp.eq.s32.totalorder %s28, 1
      %p72 = por %p70, %p71
      %p73 = scmp.ne.s32.totalorder %s62, %s63
      %p74 = scmp.eq.s32.totalorder %s28, 0
      %p75 = por %p73, %p74
      %p76 = scmp.ne.s32.totalorder %s62, %s63
      %p77 = scmp.eq.s32.totalorder %s29, 1
      %p78 = por %p76, %p77
      %p80 = scmp.ne.s32.totalorder %s63, %s79
      %p81 = scmp.eq.s32.totalorder %s29, 0
      %p82 = por %p80, %p81
      %s83 = ssub.s32 %s23, %s30
      %p84 = scmp.eq.s32.totalorder %s83, 0
      %s86 = sadd.s32 %s85, 1
      %s87 = scalar_select %p84, %s85, %s86
      %p90 = pneg %p84
      %p91 = scmp.eq.s32.totalorder %s23, 1
      %p92 = por %p90, %p91
      %p93 = scmp.ne.s32.totalorder %s85, %s88
      %p94 = scmp.eq.s32.totalorder %s23, 0
      %p95 = por %p93, %p94
      %p96 = scmp.ne.s32.totalorder %s85, %s88
      %p97 = scmp.eq.s32.totalorder %s28, 1
      %p98 = por %p96, %p97
      %p99 = scmp.ne.s32.totalorder %s88, %s89
      %p100 = scmp.eq.s32.totalorder %s28, 0
      %p101 = por %p99, %p100
      %p102 = scmp.ne.s32.totalorder %s88, %s89
      %p103 = scmp.eq.s32.totalorder %s29, 1
      %p104 = por %p102, %p103
      %p106 = scmp.ne.s32.totalorder %s89, %s105
      %p107 = scmp.eq.s32.totalorder %s29, 0
      %p108 = por %p106, %p107
      %s109 = ssub.s32 %s23, %s30
      %p110 = scmp.eq.s32.totalorder %s109, 0
      %s112 = sadd.s32 %s111, 1
      %s113 = scalar_select %p110, %s111, %s112
      %p116 = pneg %p110
      %p117 = scmp.eq.s32.totalorder %s23, 1
      %p118 = por %p116, %p117
      %p119 = scmp.ne.s32.totalorder %s111, %s114
      %p120 = scmp.eq.s32.totalorder %s23, 0
      %p121 = por %p119, %p120
      %p122 = scmp.ne.s32.totalorder %s111, %s114
      %p123 = scmp.eq.s32.totalorder %s28, 1
      %p124 = por %p122, %p123
      %p125 = scmp.ne.s32.totalorder %s114, %s115
      %p126 = scmp.eq.s32.totalorder %s28, 0
      %p127 = por %p125, %p126
      %p128 = scmp.ne.s32.totalorder %s114, %s115
      %p129 = scmp.eq.s32.totalorder %s29, 1
      %p130 = por %p128, %p129
      %p132 = scmp.ne.s32.totalorder %s115, %s131
      %p133 = scmp.eq.s32.totalorder %s29, 0
      %p134 = por %p132, %p133
      %s136 = sadd.s32 %s135, 1
      %p139 = scmp.eq.s32.totalorder %s23, 1
      %p140 = scmp.ne.s32.totalorder %s135, %s137
      %p141 = scmp.eq.s32.totalorder %s23, 0
      %p142 = por %p140, %p141
      %p143 = scmp.ne.s32.totalorder %s135, %s137
      %p144 = scmp.eq.s32.totalorder %s28, 1
      %p145 = por %p143, %p144
      %p146 = scmp.ne.s32.totalorder %s137, %s138
      %p147 = scmp.eq.s32.totalorder %s28, 0
      %p148 = por %p146, %p147
      %p149 = scmp.ne.s32.totalorder %s137, %s138
      %p150 = scmp.eq.s32.totalorder %s29, 1
      %p151 = por %p149, %p150
      %p153 = scmp.ne.s32.totalorder %s138, %s152
      %p154 = scmp.eq.s32.totalorder %s29, 0
      %p155 = por %p153, %p154
      %s157 = sadd.s32 %s156, 1
      %p160 = scmp.eq.s32.totalorder %s23, 1
      %p161 = scmp.ne.s32.totalorder %s156, %s158
      %p162 = scmp.eq.s32.totalorder %s23, 0
      %p163 = por %p161, %p162
      %p164 = scmp.ne.s32.totalorder %s156, %s158
      %p165 = scmp.eq.s32.totalorder %s28, 1
      %p166 = por %p164, %p165
      %p167 = scmp.ne.s32.totalorder %s158, %s159
      %p168 = scmp.eq.s32.totalorder %s28, 0
      %p169 = por %p167, %p168
      %p170 = scmp.ne.s32.totalorder %s158, %s159
      %p171 = scmp.eq.s32.totalorder %s29, 1
      %p172 = por %p170, %p171
      %p174 = scmp.ne.s32.totalorder %s159, %s173
      %p175 = scmp.eq.s32.totalorder %s29, 0
      %p176 = por %p174, %p175
      %s178 = sadd.s32 %s177, 1
      %p181 = scmp.eq.s32.totalorder %s23, 1
      %p182 = scmp.ne.s32.totalorder %s177, %s179
      %p183 = scmp.eq.s32.totalorder %s23, 0
      %p184 = por %p182, %p183
      %p185 = scmp.ne.s32.totalorder %s177, %s179
      %p186 = scmp.eq.s32.totalorder %s28, 1
      %p187 = por %p185, %p186
      %p188 = scmp.ne.s32.totalorder %s179, %s180
      %p189 = scmp.eq.s32.totalorder %s28, 0
      %p190 = por %p188, %p189
      %p191 = scmp.ne.s32.totalorder %s179, %s180
      %p192 = scmp.eq.s32.totalorder %s29, 1
      %p193 = por %p191, %p192
      %p195 = scmp.ne.s32.totalorder %s180, %s194
      %p196 = scmp.eq.s32.totalorder %s29, 0
      %p197 = por %p195, %p196
      %s199 = sadd.s32 %s198, 1
      %p202 = scmp.eq.s32.totalorder %s23, 1
      %p203 = scmp.ne.s32.totalorder %s198, %s200
      %p204 = scmp.eq.s32.totalorder %s23, 0
      %p205 = por %p203, %p204
      %p206 = scmp.ne.s32.totalorder %s198, %s200
      %p207 = scmp.eq.s32.totalorder %s28, 1
      %p208 = por %p206, %p207
      %p209 = scmp.ne.s32.totalorder %s200, %s201
      %p210 = scmp.eq.s32.totalorder %s28, 0
      %p211 = por %p209, %p210
      %p212 = scmp.ne.s32.totalorder %s200, %s201
      %p213 = scmp.eq.s32.totalorder %s29, 1
      %p214 = por %p212, %p213
      %p216 = scmp.ne.s32.totalorder %s201, %s215
      %p217 = scmp.eq.s32.totalorder %s29, 0
      %p218 = por %p216, %p217
      %s220 = sadd.s32 %s219, 1
      %p223 = scmp.eq.s32.totalorder %s23, 1
      %p224 = scmp.ne.s32.totalorder %s219, %s221
      %p225 = scmp.eq.s32.totalorder %s23, 0
      %p226 = por %p224, %p225
      %p227 = scmp.ne.s32.totalorder %s219, %s221
      %p228 = scmp.eq.s32.totalorder %s28, 1
      %p229 = por %p227, %p228
      %p230 = scmp.ne.s32.totalorder %s221, %s222
      %p231 = scmp.eq.s32.totalorder %s28, 0
      %p232 = por %p230, %p231
      %p233 = scmp.ne.s32.totalorder %s221, %s222
      %p234 = scmp.eq.s32.totalorder %s29, 1
      %p235 = por %p233, %p234
      %p237 = scmp.ne.s32.totalorder %s222, %s236
      %p238 = scmp.eq.s32.totalorder %s29, 0
      %p239 = por %p237, %p238
      %s241 = sadd.s32 %s240, 1
      %p244 = scmp.eq.s32.totalorder %s23, 1
      %p245 = scmp.ne.s32.totalorder %s240, %s242
      %p246 = scmp.eq.s32.totalorder %s23, 0
      %p247 = por %p245, %p246
      %p248 = scmp.ne.s32.totalorder %s240, %s242
      %p249 = scmp.eq.s32.totalorder %s28, 1
      %p250 = por %p248, %p249
      %p251 = scmp.ne.s32.totalorder %s242, %s243
      %p252 = scmp.eq.s32.totalorder %s28, 0
      %p253 = por %p251, %p252
      %p254 = scmp.ne.s32.totalorder %s242, %s243
      %p255 = scmp.eq.s32.totalorder %s29, 1
      %p256 = por %p254, %p255
      %p258 = scmp.ne.s32.totalorder %s243, %s257
      %p259 = scmp.eq.s32.totalorder %s29, 0
      %p260 = por %p258, %p259
      %s261 = ssub.s32 %s23, %s30
      %p262 = scmp.eq.s32.totalorder %s261, 0
      %s264 = sadd.s32 %s263, 1
      %s265 = scalar_select %p262, %s263, %s264
      %p268 = pneg %p262
      %p269 = scmp.eq.s32.totalorder %s23, 1
      %p270 = por %p268, %p269
      %p271 = scmp.ne.s32.totalorder %s263, %s266
      %p272 = scmp.eq.s32.totalorder %s23, 0
      %p273 = por %p271, %p272
      %p274 = scmp.ne.s32.totalorder %s263, %s266
      %p275 = scmp.eq.s32.totalorder %s28, 1
      %p276 = por %p274, %p275
      %p277 = scmp.ne.s32.totalorder %s266, %s267
      %p278 = scmp.eq.s32.totalorder %s28, 0
      %p279 = por %p277, %p278
      %p280 = scmp.ne.s32.totalorder %s266, %s267
      %p281 = scmp.eq.s32.totalorder %s29, 1
      %p282 = por %p280, %p281
      %p284 = scmp.ne.s32.totalorder %s267, %s283
      %p285 = scmp.eq.s32.totalorder %s29, 0
      %p286 = por %p284, %p285
      %p287 = scmp.le.s32.totalorder 1, %s23
      %p288 = scmp.lt.s32.totalorder %s23, 3
      %p289 = pnand %p287, %p288
      %p290 = pneg %p289
      // Predicated region
      $region9: #{tpu_custom_call.1} parent=5 // pred_check
        _
      $region10: #{tpu_custom_call.1} parent=5 // pred_check_branch
        %292 = sbr.rel (%p289) target = $region12
      $region11: #{tpu_custom_call.1} parent=5 // pred_region
        %s293 = ssub.s32 %s23, 1
        // Predicated region
        $region13: #{tpu_custom_call.1} parent=11 // pred_check
          %p294 = pneg %p148
        $region14: #{tpu_custom_call.1} parent=11 // pred_check_branch
          %296 = sbr.rel (%p294) target = $region16
        $region15: #{tpu_custom_call.1} parent=11 // pred_region
          %298 = vsyncadd [#allocation4], 0
          %s300 = sshll.u32 %s4, 4
          %s301 = int_to_ptr.vmem [resolvable:$true] %s300
          %303 = dma.vmem_to_smem %s301, 16, [#allocation2], [#allocation4]
        $region16: #{tpu_custom_call.1} parent=11 // pred_fallthru
          _
        // Predicated region
        $region17: #{tpu_custom_call.1} parent=11 // pred_check
          %p304 = pneg %p169
        $region18: #{tpu_custom_call.1} parent=11 // pred_check_branch
          %306 = sbr.rel (%p304) target = $region20
        $region19: #{tpu_custom_call.1} parent=11 // pred_region
          %308 = vsyncadd [#allocation6], 0
          %s310 = sshll.u32 %s5, 4
          %s311 = int_to_ptr.vmem [resolvable:$true] %s310
          %313 = dma.vmem_to_smem %s311, 16, [#allocation5], [#allocation6]
        $region20: #{tpu_custom_call.1} parent=11 // pred_fallthru
          _
        // Predicated region
        $region21: #{tpu_custom_call.1} parent=11 // pred_check
          %p314 = pneg %p190
        $region22: #{tpu_custom_call.1} parent=11 // pred_check_branch
          %316 = sbr.rel (%p314) target = $region24
        $region23: #{tpu_custom_call.1} parent=11 // pred_region
          %318 = vsyncadd [#allocation6], 0
          %s320 = sshll.u32 %s6, 4
          %s321 = int_to_ptr.vmem [resolvable:$true] %s320
          %323 = dma.vmem_to_smem %s321, 16, [#allocation7], [#allocation6]
        $region24: #{tpu_custom_call.1} parent=11 // pred_fallthru
          _
        // Predicated region
        $region25: #{tpu_custom_call.1} parent=11 // pred_check
          %p324 = pneg %p211
        $region26: #{tpu_custom_call.1} parent=11 // pred_check_branch
          %326 = sbr.rel (%p324) target = $region28
        $region27: #{tpu_custom_call.1} parent=11 // pred_region
          %328 = vsyncadd [#allocation9], 0
          %s330 = sshll.u32 %s7, 4
          %s331 = int_to_ptr.vmem [resolvable:$true] %s330
          %333 = dma.vmem_to_smem %s331, 16, [#allocation8], [#allocation9]
        $region28: #{tpu_custom_call.1} parent=11 // pred_fallthru
          _
        // Predicated region
        $region29: #{tpu_custom_call.1} parent=11 // pred_check
          %p334 = pneg %p232
        $region30: #{tpu_custom_call.1} parent=11 // pred_check_branch
          %336 = sbr.rel (%p334) target = $region32
        $region31: #{tpu_custom_call.1} parent=11 // pred_region
          %338 = vsyncadd [#allocation9], 0
          %s340 = sshll.u32 %s8, 4
          %s341 = int_to_ptr.vmem [resolvable:$true] %s340
          %343 = dma.vmem_to_smem %s341, 16, [#allocation10], [#allocation9]
        $region32: #{tpu_custom_call.1} parent=11 // pred_fallthru
          _
        // Predicated region
        $region33: #{tpu_custom_call.1} parent=11 // pred_check
          %p344 = pneg %p253
        $region34: #{tpu_custom_call.1} parent=11 // pred_check_branch
          %346 = sbr.rel (%p344) target = $region36
        $region35: #{tpu_custom_call.1} parent=11 // pred_region
          %348 = vsyncadd [#allocation12], 0
          %s350 = sshll.u32 %s9, 4
          %s351 = int_to_ptr.vmem [resolvable:$true] %s350
          %353 = dma.vmem_to_smem %s351, 16, [#allocation11], [#allocation12]
        $region36: #{tpu_custom_call.1} parent=11 // pred_fallthru
          _
      $region12: #{tpu_custom_call.1} parent=5 // pred_fallthru
        _
      %p354 = scmp.lt.s32.totalorder %s23, 2
      // Predicated region
      $region37: #{tpu_custom_call.1} parent=5 // pred_check
        %p355 = pneg %p354
      $region38: #{tpu_custom_call.1} parent=5 // pred_check_branch
        %357 = sbr.rel (%p355) target = $region40
      $region39: #{tpu_custom_call.1} parent=5 // pred_region
        // Predicated region
        $region41: #{tpu_custom_call.1} parent=39 // pred_check
          %p358 = pneg %p43
        $region42: #{tpu_custom_call.1} parent=39 // pred_check_branch
          %360 = sbr.rel (%p358) target = $region44
        $region43: #{tpu_custom_call.1} parent=39 // pred_region
          %p361 = scmp.lt.s32.totalorder %s23, 1
          %s362 = scalar_select %p361, %s23, 1
          %s363 = smul.addr %s362, 4
          %s364 = scalar_lea.vmem %s0, %s363
        $region44: #{tpu_custom_call.1} parent=39 // pred_fallthru
          _
        // Predicated region
        $region45: #{tpu_custom_call.1} parent=39 // pred_check
          %p365 = pneg %p69
        $region46: #{tpu_custom_call.1} parent=39 // pred_check_branch
          %367 = sbr.rel (%p365) target = $region48
        $region47: #{tpu_custom_call.1} parent=39 // pred_region
          %p368 = scmp.lt.s32.totalorder %s23, 1
          %s369 = scalar_select %p368, %s23, 1
          %s370 = smul.addr %s369, 4
          %s371 = scalar_lea.vmem %s1, %s370
        $region48: #{tpu_custom_call.1} parent=39 // pred_fallthru
          _
        // Predicated region
        $region49: #{tpu_custom_call.1} parent=39 // pred_check
          %p372 = pneg %p95
        $region50: #{tpu_custom_call.1} parent=39 // pred_check_branch
          %374 = sbr.rel (%p372) target = $region52
        $region51: #{tpu_custom_call.1} parent=39 // pred_region
          %p375 = scmp.lt.s32.totalorder %s23, 1
          %s376 = scalar_select %p375, %s23, 1
          %s377 = smul.addr %s376, 4
          %s378 = scalar_lea.vmem %s2, %s377
        $region52: #{tpu_custom_call.1} parent=39 // pred_fallthru
          _
        // Predicated region
        $region53: #{tpu_custom_call.1} parent=39 // pred_check
          %p379 = pneg %p121
        $region54: #{tpu_custom_call.1} parent=39 // pred_check_branch
          %381 = sbr.rel (%p379) target = $region56
        $region55: #{tpu_custom_call.1} parent=39 // pred_region
          %p382 = scmp.lt.s32.totalorder %s23, 1
          %s383 = scalar_select %p382, %s23, 1
          %s384 = smul.addr %s383, 4
          %s385 = scalar_lea.vmem %s3, %s384
        $region56: #{tpu_custom_call.1} parent=39 // pred_fallthru
          _
      $region40: #{tpu_custom_call.1} parent=5 // pred_fallthru
        _
      %p386 = scmp.le.s32.totalorder 1, %s23
      %p387 = scmp.lt.s32.totalorder %s23, 3
      %p388 = pnand %p386, %p387
      %p389 = pneg %p388
      // Predicated region
      $region57: #{tpu_custom_call.1} parent=5 // pred_check
        _
      $region58: #{tpu_custom_call.1} parent=5 // pred_check_branch
        %391 = sbr.rel (%p388) target = $region60
      $region59: #{tpu_custom_call.1} parent=5 // pred_region
        %s392 = ssub.s32 %s23, 1
        // Predicated region
        $region61: #{tpu_custom_call.1} parent=59 // pred_check
          %p393 = pneg %p148
        $region62: #{tpu_custom_call.1} parent=59 // pred_check_branch
          %395 = sbr.rel (%p393) target = $region64
        $region63: #{tpu_custom_call.1} parent=59 // pred_region
          %397 = dma.done [#allocation4], 16
        $region64: #{tpu_custom_call.1} parent=59 // pred_fallthru
          _
        // Predicated region
        $region65: #{tpu_custom_call.1} parent=59 // pred_check
          %p398 = pneg %p169
        $region66: #{tpu_custom_call.1} parent=59 // pred_check_branch
          %400 = sbr.rel (%p398) target = $region68
        $region67: #{tpu_custom_call.1} parent=59 // pred_region
          %402 = dma.done [#allocation6], 16
        $region68: #{tpu_custom_call.1} parent=59 // pred_fallthru
          _
        // Predicated region
        $region69: #{tpu_custom_call.1} parent=59 // pred_check
          %p403 = pneg %p190
        $region70: #{tpu_custom_call.1} parent=59 // pred_check_branch
          %405 = sbr.rel (%p403) target = $region72
        $region71: #{tpu_custom_call.1} parent=59 // pred_region
          %407 = dma.done [#allocation6], 16
        $region72: #{tpu_custom_call.1} parent=59 // pred_fallthru
          _
        // Predicated region
        $region73: #{tpu_custom_call.1} parent=59 // pred_check
          %p408 = pneg %p211
        $region74: #{tpu_custom_call.1} parent=59 // pred_check_branch
          %410 = sbr.rel (%p408) target = $region76
        $region75: #{tpu_custom_call.1} parent=59 // pred_region
          %412 = dma.done [#allocation9], 16
        $region76: #{tpu_custom_call.1} parent=59 // pred_fallthru
          _
        // Predicated region
        $region77: #{tpu_custom_call.1} parent=59 // pred_check
          %p413 = pneg %p232
        $region78: #{tpu_custom_call.1} parent=59 // pred_check_branch
          %415 = sbr.rel (%p413) target = $region80
        $region79: #{tpu_custom_call.1} parent=59 // pred_region
          %417 = dma.done [#allocation9], 16
        $region80: #{tpu_custom_call.1} parent=59 // pred_fallthru
          _
        // Predicated region
        $region81: #{tpu_custom_call.1} parent=59 // pred_check
          %p418 = pneg %p253
        $region82: #{tpu_custom_call.1} parent=59 // pred_check_branch
          %420 = sbr.rel (%p418) target = $region84
        $region83: #{tpu_custom_call.1} parent=59 // pred_region
          %422 = dma.done [#allocation12], 16
        $region84: #{tpu_custom_call.1} parent=59 // pred_fallthru
          _
        %423 = sfence
        %p424 = scmp.lt.s32.totalorder %s28, 1
        %s425 = scalar_select %p424, %s28, 1
        %s426 = smul.addr %s425, 4
        %s427 = scalar_lea.vmem %s0, %s426
        %p428 = pneg %p49
        %p429 = pneg %p46
        %p430 = scmp.lt.s32.totalorder %s28, 1
        %s431 = scalar_select %p430, %s28, 1
        %s432 = smul.addr %s431, 4
        %s433 = scalar_lea.vmem %s1, %s432
        %p434 = pneg %p75
        %p435 = pneg %p72
        %p436 = scmp.lt.s32.totalorder %s28, 1
        %s437 = scalar_select %p436, %s28, 1
        %s438 = smul.addr %s437, 4
        %s439 = scalar_lea.vmem %s2, %s438
        %p440 = pneg %p101
        %p441 = pneg %p98
        %p442 = scmp.lt.s32.totalorder %s28, 1
        %s443 = scalar_select %p442, %s28, 1
        %s444 = smul.addr %s443, 4
        %s445 = scalar_lea.vmem %s3, %s444
        %p446 = pneg %p127
        %p447 = pneg %p124
        %p448 = pneg %p148
        %p449 = pneg %p145
        %p450 = pneg %p169
        %p451 = pneg %p166
        %p452 = pneg %p190
        %p453 = pneg %p187
        %p454 = pneg %p211
        %p455 = pneg %p208
        %p456 = pneg %p232
        %p457 = pneg %p229
        %p458 = pneg %p253
        %p459 = pneg %p250
        %p460 = pneg %p279
        %p461 = pneg %p276
        %s462 = sand.u32 %s266, 1
        %s463 = scalar_lea.sflag [#allocation3], %s462
        %s464 = sand.u32 %s266, 1
        %s465 = scalar_lea.vmem [#allocation13], %s464
        %p466 = scmp.lt.s32.totalorder %s28, 1
        %s467 = scalar_select %p466, %s28, 1
        %s468 = smul.addr %s467, 4
        %s469 = scalar_lea.vmem %s0, %s468
        %p470 = scmp.lt.s32.totalorder %s28, 1
        %s471 = scalar_select %p470, %s28, 1
        %s472 = smul.addr %s471, 4
        %s473 = scalar_lea.vmem %s1, %s472
        %p474 = scmp.lt.s32.totalorder %s28, 1
        %s475 = scalar_select %p474, %s28, 1
        %s476 = smul.addr %s475, 4
        %s477 = scalar_lea.vmem %s2, %s476
        %p478 = scmp.lt.s32.totalorder %s28, 1
        %s479 = scalar_select %p478, %s28, 1
        %s480 = smul.addr %s479, 4
        %s481 = scalar_lea.vmem %s3, %s480
        %v482 = vld [vmem:[%s469] sm:$0x7]
        %v483 = vld [vmem:[%s473] sm:$0x7]
        %v484 = vld [vmem:[%s477] sm:$0xf]
        %v485 = vld [vmem:[%s481] sm:$0xf]
        %s486 = sld [smem:[#allocation2]]
        %v487 = vstv %s486
        %v488 = vmul.f32 %v487, %v484
        %s489 = sld [smem:[#allocation5]]
        %v490 = vstv %s489
        %v491 = vmul.f32 %v490, %v485
        %s492 = sld [smem:[#allocation2 + $0x6]]
        %v493 = vstv %s492
        %v494 = vmul.f32 %v493, %v484
        %v496 = vrot.slane %v494, 1
        %v498 = vadd.f32 %v488, %v496
        %s499 = sld [smem:[#allocation5 + $0x6]]
        %v500 = vstv %s499
        %v501 = vmul.f32 %v500, %v485
        %v503 = vrot.slane %v501, 1
        %v505 = vadd.f32 %v491, %v503
        %s506 = sld [smem:[#allocation2 + $0xc]]
        %v507 = vstv %s506
        %v508 = vmul.f32 %v507, %v484
        %v510 = vrot.slane %v508, 2
        %v512 = vadd.f32 %v498, %v510
        %s513 = sld [smem:[#allocation5 + $0xc]]
        %v514 = vstv %s513
        %v515 = vmul.f32 %v514, %v485
        %v517 = vrot.slane %v515, 2
        %v519 = vadd.f32 %v505, %v517
        %s520 = sld [smem:[#allocation2 + $0x12]]
        %v521 = vstv %s520
        %v522 = vmul.f32 %v521, %v484
        %v524 = vrot.slane %v522, 3
        %v526 = vadd.f32 %v512, %v524
        %s527 = sld [smem:[#allocation5 + $0x12]]
        %v528 = vstv %s527
        %v529 = vmul.f32 %v528, %v485
        %v531 = vrot.slane %v529, 3
        %v533 = vadd.f32 %v519, %v531
        %v534 = vmul.f32 %v482, %v526
        %v535 = vmul.f32 %v483, %v533
        %v536 = vsub.f32 %v534, %v535
        %v537 = vmul.f32 %v483, %v526
        %v538 = vmul.f32 %v482, %v533
        %v539 = vadd.f32 %v537, %v538
        %s540 = sld [smem:[#allocation2 + $0x1]]
        %v541 = vstv %s540
        %v542 = vmul.f32 %v541, %v484
        %s543 = sld [smem:[#allocation5 + $0x1]]
        %v544 = vstv %s543
        %v545 = vmul.f32 %v544, %v485
        %s546 = sld [smem:[#allocation2 + $0x7]]
        %v547 = vstv %s546
        %v548 = vmul.f32 %v547, %v484
        %v550 = vrot.slane %v548, 1
        %v552 = vadd.f32 %v542, %v550
        %s553 = sld [smem:[#allocation5 + $0x7]]
        %v554 = vstv %s553
        %v555 = vmul.f32 %v554, %v485
        %v557 = vrot.slane %v555, 1
        %v559 = vadd.f32 %v545, %v557
        %s560 = sld [smem:[#allocation2 + $0xd]]
        %v561 = vstv %s560
        %v562 = vmul.f32 %v561, %v484
        %v564 = vrot.slane %v562, 2
        %v566 = vadd.f32 %v552, %v564
        %s567 = sld [smem:[#allocation5 + $0xd]]
        %v568 = vstv %s567
        %v569 = vmul.f32 %v568, %v485
        %v571 = vrot.slane %v569, 2
        %v573 = vadd.f32 %v559, %v571
        %s574 = sld [smem:[#allocation2 + $0x13]]
        %v575 = vstv %s574
        %v576 = vmul.f32 %v575, %v484
        %v578 = vrot.slane %v576, 3
        %v580 = vadd.f32 %v566, %v578
        %s581 = sld [smem:[#allocation5 + $0x13]]
        %v582 = vstv %s581
        %v583 = vmul.f32 %v582, %v485
        %v585 = vrot.slane %v583, 3
        %v587 = vadd.f32 %v573, %v585
        %v588 = vmul.f32 %v482, %v580
        %v589 = vmul.f32 %v483, %v587
        %v590 = vsub.f32 %v588, %v589
        %v591 = vmul.f32 %v483, %v580
        %v592 = vmul.f32 %v482, %v587
        %v593 = vadd.f32 %v591, %v592
        %s594 = sld [smem:[#allocation2 + $0x2]]
        %v595 = vstv %s594
        %v596 = vmul.f32 %v595, %v484
        %s597 = sld [smem:[#allocation5 + $0x2]]
        %v598 = vstv %s597
        %v599 = vmul.f32 %v598, %v485
        %s600 = sld [smem:[#allocation2 + $0x8]]
        %v601 = vstv %s600
        %v602 = vmul.f32 %v601, %v484
        %v604 = vrot.slane %v602, 1
        %v606 = vadd.f32 %v596, %v604
        %s607 = sld [smem:[#allocation5 + $0x8]]
        %v608 = vstv %s607
        %v609 = vmul.f32 %v608, %v485
        %v611 = vrot.slane %v609, 1
        %v613 = vadd.f32 %v599, %v611
        %s614 = sld [smem:[#allocation2 + $0xe]]
        %v615 = vstv %s614
        %v616 = vmul.f32 %v615, %v484
        %v618 = vrot.slane %v616, 2
        %v620 = vadd.f32 %v606, %v618
        %s621 = sld [smem:[#allocation5 + $0xe]]
        %v622 = vstv %s621
        %v623 = vmul.f32 %v622, %v485
        %v625 = vrot.slane %v623, 2
        %v627 = vadd.f32 %v613, %v625
        %s628 = sld [smem:[#allocation2 + $0x14]]
        %v629 = vstv %s628
        %v630 = vmul.f32 %v629, %v484
        %v632 = vrot.slane %v630, 3
        %v634 = vadd.f32 %v620, %v632
        %s635 = sld [smem:[#allocation5 + $0x14]]
        %v636 = vstv %s635
        %v637 = vmul.f32 %v636, %v485
        %v639 = vrot.slane %v637, 3
        %v641 = vadd.f32 %v627, %v639
        %v643 = vrot.slane %v634, 7
        %v645 = vmul.f32 %v482, %v643
        %v647 = vrot.slane %v641, 7
        %v649 = vmul.f32 %v483, %v647
        %v650 = vsub.f32 %v645, %v649
        %v651 = vmul.f32 %v483, %v643
        %v652 = vmul.f32 %v482, %v647
        %v653 = vadd.f32 %v651, %v652
        %v655 = vrot.slane %v650, 1
        %v657 = vadd.f32 %v536, %v655
        %v659 = vrot.slane %v653, 1
        %v661 = vadd.f32 %v539, %v659
        %s662 = sld [smem:[#allocation2 + $0x3]]
        %v663 = vstv %s662
        %v664 = vmul.f32 %v663, %v484
        %s665 = sld [smem:[#allocation5 + $0x3]]
        %v666 = vstv %s665
        %v667 = vmul.f32 %v666, %v485
        %s668 = sld [smem:[#allocation2 + $0x9]]
        %v669 = vstv %s668
        %v670 = vmul.f32 %v669, %v484
        %v672 = vrot.slane %v670, 1
        %v674 = vadd.f32 %v664, %v672
        %s675 = sld [smem:[#allocation5 + $0x9]]
        %v676 = vstv %s675
        %v677 = vmul.f32 %v676, %v485
        %v679 = vrot.slane %v677, 1
        %v681 = vadd.f32 %v667, %v679
        %s682 = sld [smem:[#allocation2 + $0xf]]
        %v683 = vstv %s682
        %v684 = vmul.f32 %v683, %v484
        %v686 = vrot.slane %v684, 2
        %v688 = vadd.f32 %v674, %v686
        %s689 = sld [smem:[#allocation5 + $0xf]]
        %v690 = vstv %s689
        %v691 = vmul.f32 %v690, %v485
        %v693 = vrot.slane %v691, 2
        %v695 = vadd.f32 %v681, %v693
        %s696 = sld [smem:[#allocation2 + $0x15]]
        %v697 = vstv %s696
        %v698 = vmul.f32 %v697, %v484
        %v700 = vrot.slane %v698, 3
        %v702 = vadd.f32 %v688, %v700
        %s703 = sld [smem:[#allocation5 + $0x15]]
        %v704 = vstv %s703
        %v705 = vmul.f32 %v704, %v485
        %v707 = vrot.slane %v705, 3
        %v709 = vadd.f32 %v695, %v707
        %v711 = vrot.slane %v702, 7
        %v713 = vmul.f32 %v482, %v711
        %v715 = vrot.slane %v709, 7
        %v717 = vmul.f32 %v483, %v715
        %v718 = vsub.f32 %v713, %v717
        %v719 = vmul.f32 %v483, %v711
        %v720 = vmul.f32 %v482, %v715
        %v721 = vadd.f32 %v719, %v720
        %v723 = vrot.slane %v718, 1
        %v725 = vadd.f32 %v590, %v723
        %v727 = vrot.slane %v721, 1
        %v729 = vadd.f32 %v593, %v727
        %s730 = sld [smem:[#allocation2 + $0x4]]
        %v731 = vstv %s730
        %v732 = vmul.f32 %v731, %v484
        %s733 = sld [smem:[#allocation5 + $0x4]]
        %v734 = vstv %s733
        %v735 = vmul.f32 %v734, %v485
        %s736 = sld [smem:[#allocation2 + $0xa]]
        %v737 = vstv %s736
        %v738 = vmul.f32 %v737, %v484
        %v740 = vrot.slane %v738, 1
        %v742 = vadd.f32 %v732, %v740
        %s743 = sld [smem:[#allocation5 + $0xa]]
        %v744 = vstv %s743
        %v745 = vmul.f32 %v744, %v485
        %v747 = vrot.slane %v745, 1
        %v749 = vadd.f32 %v735, %v747
        %s750 = sld [smem:[#allocation2 + $0x10]]
        %v751 = vstv %s750
        %v752 = vmul.f32 %v751, %v484
        %v754 = vrot.slane %v752, 2
        %v756 = vadd.f32 %v742, %v754
        %s757 = sld [smem:[#allocation5 + $0x10]]
        %v758 = vstv %s757
        %v759 = vmul.f32 %v758, %v485
        %v761 = vrot.slane %v759, 2
        %v763 = vadd.f32 %v749, %v761
        %s764 = sld [smem:[#allocation2 + $0x16]]
        %v765 = vstv %s764
        %v766 = vmul.f32 %v765, %v484
        %v768 = vrot.slane %v766, 3
        %v770 = vadd.f32 %v756, %v768
        %s771 = sld [smem:[#allocation5 + $0x16]]
        %v772 = vstv %s771
        %v773 = vmul.f32 %v772, %v485
        %v775 = vrot.slane %v773, 3
        %v777 = vadd.f32 %v763, %v775
        %v779 = vrot.slane %v770, 6
        %v781 = vmul.f32 %v482, %v779
        %v783 = vrot.slane %v777, 6
        %v785 = vmul.f32 %v483, %v783
        %v786 = vsub.f32 %v781, %v785
        %v787 = vmul.f32 %v483, %v779
        %v788 = vmul.f32 %v482, %v783
        %v789 = vadd.f32 %v787, %v788
        %v791 = vrot.slane %v786, 2
        %v793 = vadd.f32 %v657, %v791
        %v795 = vrot.slane %v789, 2
        %v797 = vadd.f32 %v661, %v795
        %s798 = sld [smem:[#allocation2 + $0x5]]
        %v799 = vstv %s798
        %v800 = vmul.f32 %v799, %v484
        %s801 = sld [smem:[#allocation5 + $0x5]]
        %v802 = vstv %s801
        %v803 = vmul.f32 %v802, %v485
        %s804 = sld [smem:[#allocation2 + $0xb]]
        %v805 = vstv %s804
        %v806 = vmul.f32 %v805, %v484
        %v808 = vrot.slane %v806, 1
        %v810 = vadd.f32 %v800, %v808
        %s811 = sld [smem:[#allocation5 + $0xb]]
        %v812 = vstv %s811
        %v813 = vmul.f32 %v812, %v485
        %v815 = vrot.slane %v813, 1
        %v817 = vadd.f32 %v803, %v815
        %s818 = sld [smem:[#allocation2 + $0x11]]
        %v819 = vstv %s818
        %v820 = vmul.f32 %v819, %v484
        %v822 = vrot.slane %v820, 2
        %v824 = vadd.f32 %v810, %v822
        %s825 = sld [smem:[#allocation5 + $0x11]]
        %v826 = vstv %s825
        %v827 = vmul.f32 %v826, %v485
        %v829 = vrot.slane %v827, 2
        %v831 = vadd.f32 %v817, %v829
        %s832 = sld [smem:[#allocation2 + $0x17]]
        %v833 = vstv %s832
        %v834 = vmul.f32 %v833, %v484
        %v836 = vrot.slane %v834, 3
        %v838 = vadd.f32 %v824, %v836
        %s839 = sld [smem:[#allocation5 + $0x17]]
        %v840 = vstv %s839
        %v841 = vmul.f32 %v840, %v485
        %v843 = vrot.slane %v841, 3
        %v845 = vadd.f32 %v831, %v843
        %v847 = vrot.slane %v838, 6
        %v849 = vmul.f32 %v482, %v847
        %v851 = vrot.slane %v845, 6
        %v853 = vmul.f32 %v483, %v851
        %v854 = vsub.f32 %v849, %v853
        %v855 = vmul.f32 %v483, %v847
        %v856 = vmul.f32 %v482, %v851
        %v857 = vadd.f32 %v855, %v856
        %v859 = vrot.slane %v854, 2
        %v861 = vadd.f32 %v725, %v859
        %v863 = vrot.slane %v857, 2
        %v865 = vadd.f32 %v729, %v863
        %s866 = sld [smem:[#allocation7]]
        %v867 = vstv %s866
        %v868 = vmul.f32 %v867, %v793
        %s869 = sld [smem:[#allocation8]]
        %v870 = vstv %s869
        %v871 = vmul.f32 %v870, %v797
        %s872 = sld [smem:[#allocation7 + $0x6]]
        %v873 = vstv %s872
        %v874 = vmul.f32 %v873, %v861
        %v875 = vadd.f32 %v868, %v874
        %s876 = sld [smem:[#allocation8 + $0x6]]
        %v877 = vstv %s876
        %v878 = vmul.f32 %v877, %v865
        %v879 = vadd.f32 %v871, %v878
        %v880 = vmul.f32 %v482, %v875
        %v881 = vmul.f32 %v483, %v879
        %v882 = vsub.f32 %v880, %v881
        %v883 = vmul.f32 %v483, %v875
        %v884 = vmul.f32 %v482, %v879
        %v885 = vadd.f32 %v883, %v884
        %s886 = sld [smem:[#allocation7 + $0x1]]
        %v887 = vstv %s886
        %v888 = vmul.f32 %v887, %v793
        %s889 = sld [smem:[#allocation8 + $0x1]]
        %v890 = vstv %s889
        %v891 = vmul.f32 %v890, %v797
        %s892 = sld [smem:[#allocation7 + $0x7]]
        %v893 = vstv %s892
        %v894 = vmul.f32 %v893, %v861
        %v895 = vadd.f32 %v888, %v894
        %s896 = sld [smem:[#allocation8 + $0x7]]
        %v897 = vstv %s896
        %v898 = vmul.f32 %v897, %v865
        %v899 = vadd.f32 %v891, %v898
        %v900 = vmul.f32 %v482, %v895
        %v901 = vmul.f32 %v483, %v899
        %v902 = vsub.f32 %v900, %v901
        %v903 = vmul.f32 %v483, %v895
        %v904 = vmul.f32 %v482, %v899
        %v905 = vadd.f32 %v903, %v904
        %s906 = sld [smem:[#allocation7 + $0x2]]
        %v907 = vstv %s906
        %v908 = vmul.f32 %v907, %v793
        %s909 = sld [smem:[#allocation8 + $0x2]]
        %v910 = vstv %s909
        %v911 = vmul.f32 %v910, %v797
        %s912 = sld [smem:[#allocation7 + $0x8]]
        %v913 = vstv %s912
        %v914 = vmul.f32 %v913, %v861
        %v915 = vadd.f32 %v908, %v914
        %s916 = sld [smem:[#allocation8 + $0x8]]
        %v917 = vstv %s916
        %v918 = vmul.f32 %v917, %v865
        %v919 = vadd.f32 %v911, %v918
        %v921 = vrot.slane %v915, 7
        %v923 = vmul.f32 %v482, %v921
        %v925 = vrot.slane %v919, 7
        %v927 = vmul.f32 %v483, %v925
        %v928 = vsub.f32 %v923, %v927
        %v929 = vmul.f32 %v483, %v921
        %v930 = vmul.f32 %v482, %v925
        %v931 = vadd.f32 %v929, %v930
        %v933 = vrot.slane %v928, 1
        %v935 = vadd.f32 %v882, %v933
        %v937 = vrot.slane %v931, 1
        %v939 = vadd.f32 %v885, %v937
        %s940 = sld [smem:[#allocation7 + $0x3]]
        %v941 = vstv %s940
        %v942 = vmul.f32 %v941, %v793
        %s943 = sld [smem:[#allocation8 + $0x3]]
        %v944 = vstv %s943
        %v945 = vmul.f32 %v944, %v797
        %s946 = sld [smem:[#allocation7 + $0x9]]
        %v947 = vstv %s946
        %v948 = vmul.f32 %v947, %v861
        %v949 = vadd.f32 %v942, %v948
        %s950 = sld [smem:[#allocation8 + $0x9]]
        %v951 = vstv %s950
        %v952 = vmul.f32 %v951, %v865
        %v953 = vadd.f32 %v945, %v952
        %v955 = vrot.slane %v949, 7
        %v957 = vmul.f32 %v482, %v955
        %v959 = vrot.slane %v953, 7
        %v961 = vmul.f32 %v483, %v959
        %v962 = vsub.f32 %v957, %v961
        %v963 = vmul.f32 %v483, %v955
        %v964 = vmul.f32 %v482, %v959
        %v965 = vadd.f32 %v963, %v964
        %v967 = vrot.slane %v962, 1
        %v969 = vadd.f32 %v902, %v967
        %v971 = vrot.slane %v965, 1
        %v973 = vadd.f32 %v905, %v971
        %s974 = sld [smem:[#allocation7 + $0x4]]
        %v975 = vstv %s974
        %v976 = vmul.f32 %v975, %v793
        %s977 = sld [smem:[#allocation8 + $0x4]]
        %v978 = vstv %s977
        %v979 = vmul.f32 %v978, %v797
        %s980 = sld [smem:[#allocation7 + $0xa]]
        %v981 = vstv %s980
        %v982 = vmul.f32 %v981, %v861
        %v983 = vadd.f32 %v976, %v982
        %s984 = sld [smem:[#allocation8 + $0xa]]
        %v985 = vstv %s984
        %v986 = vmul.f32 %v985, %v865
        %v987 = vadd.f32 %v979, %v986
        %v989 = vrot.slane %v983, 6
        %v991 = vmul.f32 %v482, %v989
        %v993 = vrot.slane %v987, 6
        %v995 = vmul.f32 %v483, %v993
        %v996 = vsub.f32 %v991, %v995
        %v997 = vmul.f32 %v483, %v989
        %v998 = vmul.f32 %v482, %v993
        %v999 = vadd.f32 %v997, %v998
        %v1001 = vrot.slane %v996, 2
        %v1003 = vadd.f32 %v935, %v1001
        %v1005 = vrot.slane %v999, 2
        %v1007 = vadd.f32 %v939, %v1005
        %s1008 = sld [smem:[#allocation7 + $0x5]]
        %v1009 = vstv %s1008
        %v1010 = vmul.f32 %v1009, %v793
        %s1011 = sld [smem:[#allocation8 + $0x5]]
        %v1012 = vstv %s1011
        %v1013 = vmul.f32 %v1012, %v797
        %s1014 = sld [smem:[#allocation7 + $0xb]]
        %v1015 = vstv %s1014
        %v1016 = vmul.f32 %v1015, %v861
        %v1017 = vadd.f32 %v1010, %v1016
        %s1018 = sld [smem:[#allocation8 + $0xb]]
        %v1019 = vstv %s1018
        %v1020 = vmul.f32 %v1019, %v865
        %v1021 = vadd.f32 %v1013, %v1020
        %v1023 = vrot.slane %v1017, 6
        %v1025 = vmul.f32 %v482, %v1023
        %v1027 = vrot.slane %v1021, 6
        %v1029 = vmul.f32 %v483, %v1027
        %v1030 = vsub.f32 %v1025, %v1029
        %v1031 = vmul.f32 %v483, %v1023
        %v1032 = vmul.f32 %v482, %v1027
        %v1033 = vadd.f32 %v1031, %v1032
        %v1035 = vrot.slane %v1030, 2
        %v1037 = vadd.f32 %v969, %v1035
        %v1039 = vrot.slane %v1033, 2
        %v1041 = vadd.f32 %v973, %v1039
        %vm1042 = vcmp.ge.f32.partialorder %v1003, 0.0
        %v1043 = vsel %vm1042, %v1003, 0.0
        %v1044 = vsel %vm1042, %v1007, 0.0
        %vm1045 = vcmask 122880
        %v1046 = vsel %vm1045, %v1043, 0.0
        %1047 = vadd.xlane.f32.xlu0 %v1046
        %v1048 = vpop.xlane.xlu0 %1047
        %v1049 = vrcp.pop 16.0
        %v1050 = vmul.f32 16.0, %v1049
        %v1051 = vsub.f32 1.0, %v1050
        %v1052 = vmul.f32 %v1049, %v1051
        %v1053 = vadd.f32 %v1049, %v1052
        %vm1054 = vweird.f32 %v1049
        %v1055 = vsel %vm1054, %v1049, %v1053
        %v1056 = vmul.f32 %v1048, %v1055
        %v1057 = vsel %vm1045, %v1044, 0.0
        %1058 = vadd.xlane.f32.xlu0 %v1057
        %v1059 = vpop.xlane.xlu0 %1058
        %v1060 = vmul.f32 %v1059, %v1055
        %vm1061 = vcmp.ge.f32.partialorder %v1037, 0.0
        %v1062 = vsel %vm1061, %v1037, 0.0
        %v1063 = vsel %vm1061, %v1041, 0.0
        %v1064 = vsel %vm1045, %v1062, 0.0
        %1065 = vadd.xlane.f32.xlu0 %v1064
        %v1066 = vpop.xlane.xlu0 %1065
        %v1067 = vmul.f32 %v1066, %v1055
        %v1068 = vsel %vm1045, %v1063, 0.0
        %1069 = vadd.xlane.f32.xlu0 %v1068
        %v1070 = vpop.xlane.xlu0 %1069
        %v1071 = vmul.f32 %v1070, %v1055
        %s1072 = sld [smem:[#allocation10]]
        %v1073 = vstv %s1072
        %v1074 = vmul.f32 %v1056, %v1073
        %s1075 = sld [smem:[#allocation10 + $0x4]]
        %v1076 = vstv %s1075
        %v1077 = vmul.f32 %v1060, %v1076
        %v1078 = vadd.f32 %v1074, %v1077
        %s1079 = sld [smem:[#allocation10 + $0x2]]
        %v1080 = vstv %s1079
        %v1081 = vmul.f32 %v1067, %v1080
        %v1082 = vadd.f32 %v1078, %v1081
        %s1083 = sld [smem:[#allocation10 + $0x6]]
        %v1084 = vstv %s1083
        %v1085 = vmul.f32 %v1071, %v1084
        %v1086 = vadd.f32 %v1082, %v1085
        %s1087 = sld [smem:[#allocation11]]
        %v1088 = vstv %s1087
        %v1089 = vadd.f32 %v1086, %v1088
        %s1090 = sld [smem:[#allocation10 + $0x1]]
        %v1091 = vstv %s1090
        %v1092 = vmul.f32 %v1056, %v1091
        %s1093 = sld [smem:[#allocation10 + $0x5]]
        %v1094 = vstv %s1093
        %v1095 = vmul.f32 %v1060, %v1094
        %v1096 = vadd.f32 %v1092, %v1095
        %s1097 = sld [smem:[#allocation10 + $0x3]]
        %v1098 = vstv %s1097
        %v1099 = vmul.f32 %v1067, %v1098
        %v1100 = vadd.f32 %v1096, %v1099
        %s1101 = sld [smem:[#allocation10 + $0x7]]
        %v1102 = vstv %s1101
        %v1103 = vmul.f32 %v1071, %v1102
        %v1104 = vadd.f32 %v1100, %v1103
        %s1105 = sld [smem:[#allocation11 + $0x1]]
        %v1106 = vstv %s1105
        %v1107 = vadd.f32 %v1104, %v1106
        %vm1108 = vcmask 7168
        %v1109 = vsel %vm1108, %v1089, %v1107
        %vm1110 = vcmask 8192
        %1111 = vst.msk [vmem:[%s465] sm:$0x1] %vm1110, %v1109
        %s1112 = sand.u32 %s266, 1
        %s1113 = scalar_lea.sflag [#allocation3], %s1112
        %s1114 = sand.u32 %s266, 1
        %s1115 = scalar_lea.vmem [#allocation13], %s1114
        // Predicated region
        $region85: #{tpu_custom_call.1} parent=59 // pred_check
          %p1116 = pneg %p276
        $region86: #{tpu_custom_call.1} parent=59 // pred_check_branch
          %1118 = sbr.rel (%p1116) target = $region88
        $region87: #{tpu_custom_call.1} parent=59 // pred_region
          %1120 = vsyncadd %s1113, 0
          %s1121 = scalar_lea.hbm %s10, %s28
          %s1123 = sshll.u32 %s1115, 4
          %s1124 = int_to_ptr.vmem [resolvable:$true] %s1123
          %s1125 = sshll.u32 %s1121, 4
          %s1126 = int_to_ptr.hbm [resolvable:$true] %s1125
          %1128 = dma.vmem_to_hbm [thread:$0]  %s1124, 16, %s1126, %s1113
        $region88: #{tpu_custom_call.1} parent=59 // pred_fallthru
          _
      $region60: #{tpu_custom_call.1} parent=5 // pred_fallthru
        _
      %p1129 = scmp.le.s32.totalorder 2, %s23
      // Predicated region
      $region89: #{tpu_custom_call.1} parent=5 // pred_check
        %p1130 = pneg %p1129
      $region90: #{tpu_custom_call.1} parent=5 // pred_check_branch
        %1132 = sbr.rel (%p1130) target = $region92
      $region91: #{tpu_custom_call.1} parent=5 // pred_region
        %s1133 = ssub.s32 %s23, 2
        // Predicated region
        $region93: #{tpu_custom_call.1} parent=91 // pred_check
          %p1134 = pneg %p282
        $region94: #{tpu_custom_call.1} parent=91 // pred_check_branch
          %1136 = sbr.rel (%p1134) target = $region96
        $region95: #{tpu_custom_call.1} parent=91 // pred_region
          %s1137 = sand.u32 %s267, 1
          %s1138 = scalar_lea.sflag [#allocation3], %s1137
          %s1139 = sand.u32 %s267, 1
          %s1140 = scalar_lea.vmem [#allocation13], %s1139
          %1142 = dma.done %s1138, 16
        $region96: #{tpu_custom_call.1} parent=91 // pred_fallthru
          _
      $region92: #{tpu_custom_call.1} parent=5 // pred_fallthru
        _
    $region6: #{tpu_custom_call.1} parent=1 // loop_footer
      %s27 = sadd.s32 1, %s23
    $region7: #{tpu_custom_call.1} parent=1 // loop_footer_branch
      %22 = sbr.rel target = $region3
    $region8: #{tpu_custom_call.1} parent=1 // loop_exit
      _
    %1143 = vsyncpa [#allocation3], 1
    %s1144 = scalar_lea.sflag [#allocation3], 1
    %1145 = vsyncpa %s1144, 1
    %1146 = vsyncpa [#allocation4], 1
    %s1147 = scalar_lea.sflag [#allocation4], 1
    %1148 = vsyncpa %s1147, 1
    %1149 = vsyncpa [#allocation6], 1
    %1150 = vsyncpa [#allocation9], 1
    %1151 = vsyncpa [#allocation12], 1

</llo_original>
